<compile_context>
chip_gen: v7x
topology: tpu7x:2x2x1
jax: 0.10.0
libtpu: 0.0.40
codegen_flags: <defaults>
</compile_context>

<pallas_src>
import functools

import jax
import jax.numpy as jnp
from jax.experimental import pallas as pl
from jax.experimental.pallas import tpu as pltpu

EPS = 1e-7


def _softmax_over_clusters(logits):
    """Numerically stable softmax across a python list (the cluster axis)."""
    m = logits[0]
    for lk in logits[1:]:
        m = jnp.maximum(m, lk)
    e = [jnp.exp(lk - m) for lk in logits]
    denom = e[0]
    for ek in e[1:]:
        denom = denom + ek
    inv_denom = pl.reciprocal(denom)       # one EUP pass instead of K divides
    return [ek * inv_denom for ek in e]


def _em_routing_kernel(w_ref, x_ref, b_ref, o_ref, *, clusters, groups,
                       out_channels, iters):
    """Block-diagonal 1x1 conv (MXU) + EM routing (VPU/EUP/XLU), unrolled."""
    K, G, OC = clusters, groups, out_channels
    T = x_ref.shape[-1]

    # ---- grouped 1x1 conv as ONE block-diagonal MXU matmul -------------------
    # w_ref: (K*OC*G, G*Cin), cluster-major rows, block-diagonal over groups.
    # x_ref: (G*Cin, T)  ->  conv: (K*OC*G, T)
    conv = jnp.dot(w_ref[...], x_ref[...], preferred_element_type=jnp.float32)

    # (K*OC, G, T): sublane dim = G (8-aligned when G % 8 == 0), lane dim = T.
    con4 = conv.reshape(K * OC, G, T)
    con = [con4[k * OC:(k + 1) * OC] for k in range(K)]       # K x (OC, G, T)

    # ---- EM iteration 0: r_ik is the uniform constant 1/K --------------------
    # r_k = G/K + eps is identical for every cluster, so pi_k is constant and
    # cancels in the softmax; mean/var collapse to scaled plain group sums.
    scale0 = 1.0 / (G + K * EPS)           # == (1/K) / (G/K + eps)
    logits = []
    for k in range(K):
        s1 = jnp.sum(con[k], axis=1, keepdims=True)                 # (OC,1,T)
        s2 = jnp.sum(con[k] * con[k], axis=1, keepdims=True)
        mean = s1 * scale0
        var = s2 * scale0 - mean * mean + EPS
        neg_half_inv_var = -0.5 * pl.reciprocal(var)                # reduced-size EUP
        lbias = -0.5 * jnp.log(var)                                 # log(pi) dropped (const)
        d = con[k] - mean
        logits.append(d * d * neg_half_inv_var + lbias)
    r_ik = _softmax_over_clusters(logits)

    # ---- EM iterations 1 .. iters-1 (python unroll; early return on last) ----
    for it in range(1, iters):
        r_k, inv_rk, rc, mean = [], [], [], []
        for k in range(K):
            rk = jnp.sum(r_ik[k], axis=1, keepdims=True) + EPS      # (OC,1,T)
            irk = pl.reciprocal(rk)                                 # reduced-size EUP
            rck = r_ik[k] * con[k]                                  # reused for mean & var
            r_k.append(rk)
            inv_rk.append(irk)
            rc.append(rck)
            mean.append(jnp.sum(rck, axis=1, keepdims=True) * irk)  # (OC,1,T)

        if it == iters - 1:
            for k in range(K):
                for o in range(OC):
                    row = k * OC + o
                    o_ref[pl.ds(row, 1), :] = mean[k][o] + b_ref[pl.ds(row, 1), :]
            return

        logits = []
        for k in range(K):
            s2 = jnp.sum(rc[k] * con[k], axis=1, keepdims=True)
            var = s2 * inv_rk[k] - mean[k] * mean[k] + EPS
            neg_half_inv_var = -0.5 * pl.reciprocal(var)
            # log(pi_k) = log(r_k) - log(G); the -log(G) constant cancels in softmax.
            lbias = jnp.log(r_k[k]) - 0.5 * jnp.log(var)
            d = con[k] - mean[k]
            logits.append(d * d * neg_half_inv_var + lbias)
        r_ik = _softmax_over_clusters(logits)


def em_routing2d_forward(x, weight, bias, *, in_channels, out_channels,
                         clusters=3, groups=32, iters=3, tile_n=512):
    """Pallas implementation of EMRouting2d.forward for iters >= 2.

    x      : (B, groups*in_channels, H, W)  float32 (NCHW, like PyTorch)
    weight : (clusters*out_channels, groups*in_channels, 1, 1)
    bias   : (clusters*out_channels,)
    returns: (B, clusters*out_channels, H, W)
    """
    # TODO(synk): iters == 1 path (plain dense conv2d + bias) not implemented here.
    assert iters >= 2
    B, C, H, W = x.shape
    K, OC, G, Cin = clusters, out_channels, groups, in_channels
    assert C == G * Cin
    N = B * H * W

    # lane tiling: multiple of 128; pad N with zeros (padded lanes are
    # independent of real ones and are sliced off afterwards).
    tile_n = max(128, 128 * (int(tile_n) // 128))
    tile_n = min(tile_n, ((N + 127) // 128) * 128)
    n_pad = ((N + tile_n - 1) // tile_n) * tile_n
    grid = (n_pad // tile_n,)

    # glue: x -> (G*Cin, N_pad) with lane index n = b*(H*W) + hw
    x_k = jnp.transpose(x.reshape(B, C, H * W), (1, 0, 2)).reshape(C, N)
    x_k = x_k.astype(jnp.float32)
    if n_pad != N:
        x_k = jnp.pad(x_k, ((0, 0), (0, n_pad - N)))

    # block-diagonal, cluster-major weight:
    #   W_bd[(k*OC+o)*G + g, g*Cin + i] = weight[k*OC+o, g*Cin+i, 0, 0]
    w2 = weight[:, :, 0, 0].astype(jnp.float32).reshape(K * OC, G, Cin)
    w_bd = jnp.einsum('cgi,gh->cghi', w2, jnp.eye(G, dtype=jnp.float32))
    w_bd = w_bd.reshape(K * OC * G, G * Cin)

    b_k = bias.reshape(K * OC, 1).astype(jnp.float32)

    # explicit scoped-VMEM budget (clamped so it stays valid on v7x's 64 MiB).
    vmem_est = (4 * tile_n * (10 * K * OC * G + 4 * G * Cin + 4 * K * OC)
                + 8 * (K * OC * G) * (G * Cin) + (2 << 20))
    vmem_limit = int(min(max(vmem_est, 32 * 1024 * 1024), 64 * 1024 * 1024))

    out = pl.pallas_call(
        functools.partial(_em_routing_kernel, clusters=K, groups=G,
                          out_channels=OC, iters=iters),
        out_shape=jax.ShapeDtypeStruct((K * OC, n_pad), jnp.float32),
        grid_spec=pltpu.PrefetchScalarGridSpec(
            num_scalar_prefetch=0,
            grid=grid,
            in_specs=[
                pl.BlockSpec((K * OC * G, G * Cin), lambda n: (0, 0)),  # W_bd (resident)
                pl.BlockSpec((G * Cin, tile_n), lambda n: (0, n)),      # x, tiled over N
                pl.BlockSpec((K * OC, 1), lambda n: (0, 0)),            # bias (resident)
            ],
            out_specs=pl.BlockSpec((K * OC, tile_n), lambda n: (0, n)),
        ),
        compiler_params=pltpu.CompilerParams(
            dimension_semantics=("parallel",),
            vmem_limit_bytes=vmem_limit,
        ),
    )(w_bd, x_k, b_k)

    # glue: back to NCHW
    out = out[:, :N]
    return jnp.transpose(out.reshape(K * OC, B, H, W), (1, 0, 2, 3))


# ---------------------------- pure-JAX reference -----------------------------
def _em_routing_ref(x, clusters, groups, iters, bias=None, epsilon=1e-7):
    batch = x.shape[0]
    spatial = x.shape[2:]
    x = x.reshape(batch, groups, clusters, -1, *spatial)
    r_ik = jnp.ones((1,) + x.shape[1:], jnp.float32) / clusters
    for i in range(iters):
        r_k = r_ik.sum(axis=1, keepdims=True) + epsilon
        mean = (r_ik * x).sum(axis=1, keepdims=True) / r_k
        if i == iters - 1:
            mean = mean.reshape(batch, -1, *spatial)
            return mean if bias is None else mean + bias.reshape(1, -1, 1, 1)
        var = (r_ik * x ** 2).sum(axis=1, keepdims=True) / r_k - mean ** 2 + epsilon
        pi_k = r_k / groups
        log_p = -((x - mean) ** 2 / var + jnp.log(var)) / 2
        r_ik = jax.nn.softmax(log_p + jnp.log(pi_k), axis=2)


def _forward_ref(x, weight, bias, *, in_channels, clusters, groups, iters):
    B, C, H, W = x.shape
    KO = weight.shape[0]
    wg = jnp.transpose(weight[:, :, 0, 0].reshape(KO, groups, in_channels), (1, 0, 2))
    xg = x.reshape(B, groups, in_channels, H, W)
    con = jnp.einsum('gki,bgihw->bgkhw', wg, xg).reshape(B, groups * KO, H, W)
    return _em_routing_ref(con, clusters, groups, iters, bias)


# ------------------------------------ main ------------------------------------
if __name__ == "__main__":
    # small config consistent with the module
    B, H, W = 2, 10, 10
    in_channels, out_channels = 4, 4
    clusters, groups, iters = 3, 8, 3

    key = jax.random.PRNGKey(0)
    kx, kw = jax.random.split(key)

    # input: (B, groups*in_channels, H, W) -> (2, 32, 10, 10)
    x = jax.random.normal(kx, (B, groups * in_channels, H, W), jnp.float32)

    # deterministic parameter init matching nn.Module.__init__:
    #   weight ~ kaiming_normal_ (fan_in = groups*in_channels, gain = sqrt(2))
    fan_in = groups * in_channels
    std = (2.0 / fan_in) ** 0.5
    weight = std * jax.random.normal(
        kw, (clusters * out_channels, groups * in_channels, 1, 1), jnp.float32)
    bias = jnp.zeros((clusters * out_channels,), jnp.float32)

    # tile_n=128 here only to exercise multi-step grid + N padding on the tiny
    # demo shape (N = 200); for production sizes use the default 512 (or larger
    # on v5e/v6e).
    out = em_routing2d_forward(
        x, weight, bias,
        in_channels=in_channels, out_channels=out_channels,
        clusters=clusters, groups=groups, iters=iters, tile_n=128)
    out = jax.block_until_ready(out)

    ref = _forward_ref(x, weight, bias, in_channels=in_channels,
                       clusters=clusters, groups=groups, iters=iters)
    assert out.shape == (B, clusters * out_channels, H, W)
    err = float(jnp.max(jnp.abs(out - ref)))
    assert jnp.allclose(out, ref, rtol=1e-4, atol=1e-4), err

    print("KERNEL_OK")
</pallas_src>

<mosaic_0001>
module attributes {stable_mosaic.version = 11 : i64} {
  func.func @_em_routing_kernel(%arg0: i32, %arg1: memref<96x32xf32, #tpu.memory_space<vmem>>, %arg2: memref<32x128xf32, #tpu.memory_space<vmem>>, %arg3: memref<12x1xf32, #tpu.memory_space<vmem>>, %arg4: memref<12x128xf32, #tpu.memory_space<vmem>>) attributes {dimension_semantics = [#tpu.dimension_semantics<parallel>], iteration_bounds = array<i64: 2>, scalar_prefetch = 0 : i64, scratch_operands = 0 : i64, tpu.core_type = #tpu.core_type<tc>, window_params = [{pipeline_mode = #tpu.pipeline_mode<synchronous>, transform_indices = @transform_0, window_bounds = array<i64: 96, 32>}, {transform_indices = @transform_1, window_bounds = array<i64: 32, 128>}, {pipeline_mode = #tpu.pipeline_mode<synchronous>, transform_indices = @transform_2, window_bounds = array<i64: 12, 1>}, {transform_indices = @transform_3, window_bounds = array<i64: 12, 128>}]} {
    %c0 = arith.constant 0 : index
    %c0_0 = arith.constant 0 : index
    %0 = vector.load %arg1[%c0, %c0_0] : memref<96x32xf32, #tpu.memory_space<vmem>>, vector<96x32xf32>
    %c0_1 = arith.constant 0 : index
    %c0_2 = arith.constant 0 : index
    %1 = vector.load %arg2[%c0_1, %c0_2] : memref<32x128xf32, #tpu.memory_space<vmem>>, vector<32x128xf32>
    %cst = arith.constant dense<0.000000e+00> : vector<96x128xf32>
    %2 = tpu.matmul %0, %1, %cst {dimension_numbers = #tpu.dot_dimension_numbers<[1], [0], [0], [1], [0, 0, 1, 1], [], []>} : vector<96x32xf32>, vector<32x128xf32>, vector<96x128xf32> -> vector<96x128xf32>
    %3 = vector.shape_cast %2 : vector<96x128xf32> to vector<12x8x128xf32>
    %4 = vector.extract_strided_slice %3 {offsets = [0, 0, 0], sizes = [4, 8, 128], strides = [1, 1, 1]} : vector<12x8x128xf32> to vector<4x8x128xf32>
    %5 = vector.extract_strided_slice %3 {offsets = [4, 0, 0], sizes = [4, 8, 128], strides = [1, 1, 1]} : vector<12x8x128xf32> to vector<4x8x128xf32>
    %6 = vector.extract_strided_slice %3 {offsets = [8, 0, 0], sizes = [4, 8, 128], strides = [1, 1, 1]} : vector<12x8x128xf32> to vector<4x8x128xf32>
    %cst_3 = arith.constant dense<0.000000e+00> : vector<4x128xf32>
    %7 = vector.multi_reduction <add>, %4, %cst_3 [1] : vector<4x8x128xf32> to vector<4x128xf32>
    %8 = vector.shape_cast %7 : vector<4x128xf32> to vector<4x1x128xf32>
    %9 = arith.mulf %4, %4 : vector<4x8x128xf32>
    %cst_4 = arith.constant dense<0.000000e+00> : vector<4x128xf32>
    %10 = vector.multi_reduction <add>, %9, %cst_4 [1] : vector<4x8x128xf32> to vector<4x128xf32>
    %11 = vector.shape_cast %10 : vector<4x128xf32> to vector<4x1x128xf32>
    %cst_5 = arith.constant 0.124999993 : f32
    %12 = vector.broadcast %cst_5 : f32 to vector<4x1x128xf32>
    %13 = arith.mulf %8, %12 : vector<4x1x128xf32>
    %cst_6 = arith.constant 0.124999993 : f32
    %14 = vector.broadcast %cst_6 : f32 to vector<4x1x128xf32>
    %15 = arith.mulf %11, %14 : vector<4x1x128xf32>
    %16 = arith.mulf %13, %13 : vector<4x1x128xf32>
    %17 = arith.subf %15, %16 : vector<4x1x128xf32>
    %cst_7 = arith.constant 1.000000e-07 : f32
    %18 = vector.broadcast %cst_7 : f32 to vector<4x1x128xf32>
    %19 = arith.addf %17, %18 : vector<4x1x128xf32>
    %20 = tpu.reciprocal %19 : vector<4x1x128xf32> -> vector<4x1x128xf32>
    %cst_8 = arith.constant -5.000000e-01 : f32
    %21 = vector.broadcast %cst_8 : f32 to vector<4x1x128xf32>
    %22 = arith.mulf %21, %20 : vector<4x1x128xf32>
    %23 = math.log %19 : vector<4x1x128xf32>
    %cst_9 = arith.constant -5.000000e-01 : f32
    %24 = vector.broadcast %cst_9 : f32 to vector<4x1x128xf32>
    %25 = arith.mulf %24, %23 : vector<4x1x128xf32>
    %26 = vector.broadcast %13 : vector<4x1x128xf32> to vector<4x8x128xf32>
    %27 = arith.subf %4, %26 : vector<4x8x128xf32>
    %28 = arith.mulf %27, %27 : vector<4x8x128xf32>
    %29 = vector.broadcast %22 : vector<4x1x128xf32> to vector<4x8x128xf32>
    %30 = arith.mulf %28, %29 : vector<4x8x128xf32>
    %31 = vector.broadcast %25 : vector<4x1x128xf32> to vector<4x8x128xf32>
    %32 = arith.addf %30, %31 : vector<4x8x128xf32>
    %cst_10 = arith.constant dense<0.000000e+00> : vector<4x128xf32>
    %33 = vector.multi_reduction <add>, %5, %cst_10 [1] : vector<4x8x128xf32> to vector<4x128xf32>
    %34 = vector.shape_cast %33 : vector<4x128xf32> to vector<4x1x128xf32>
    %35 = arith.mulf %5, %5 : vector<4x8x128xf32>
    %cst_11 = arith.constant dense<0.000000e+00> : vector<4x128xf32>
    %36 = vector.multi_reduction <add>, %35, %cst_11 [1] : vector<4x8x128xf32> to vector<4x128xf32>
    %37 = vector.shape_cast %36 : vector<4x128xf32> to vector<4x1x128xf32>
    %cst_12 = arith.constant 0.124999993 : f32
    %38 = vector.broadcast %cst_12 : f32 to vector<4x1x128xf32>
    %39 = arith.mulf %34, %38 : vector<4x1x128xf32>
    %cst_13 = arith.constant 0.124999993 : f32
    %40 = vector.broadcast %cst_13 : f32 to vector<4x1x128xf32>
    %41 = arith.mulf %37, %40 : vector<4x1x128xf32>
    %42 = arith.mulf %39, %39 : vector<4x1x128xf32>
    %43 = arith.subf %41, %42 : vector<4x1x128xf32>
    %cst_14 = arith.constant 1.000000e-07 : f32
    %44 = vector.broadcast %cst_14 : f32 to vector<4x1x128xf32>
    %45 = arith.addf %43, %44 : vector<4x1x128xf32>
    %46 = tpu.reciprocal %45 : vector<4x1x128xf32> -> vector<4x1x128xf32>
    %cst_15 = arith.constant -5.000000e-01 : f32
    %47 = vector.broadcast %cst_15 : f32 to vector<4x1x128xf32>
    %48 = arith.mulf %47, %46 : vector<4x1x128xf32>
    %49 = math.log %45 : vector<4x1x128xf32>
    %cst_16 = arith.constant -5.000000e-01 : f32
    %50 = vector.broadcast %cst_16 : f32 to vector<4x1x128xf32>
    %51 = arith.mulf %50, %49 : vector<4x1x128xf32>
    %52 = vector.broadcast %39 : vector<4x1x128xf32> to vector<4x8x128xf32>
    %53 = arith.subf %5, %52 : vector<4x8x128xf32>
    %54 = arith.mulf %53, %53 : vector<4x8x128xf32>
    %55 = vector.broadcast %48 : vector<4x1x128xf32> to vector<4x8x128xf32>
    %56 = arith.mulf %54, %55 : vector<4x8x128xf32>
    %57 = vector.broadcast %51 : vector<4x1x128xf32> to vector<4x8x128xf32>
    %58 = arith.addf %56, %57 : vector<4x8x128xf32>
    %cst_17 = arith.constant dense<0.000000e+00> : vector<4x128xf32>
    %59 = vector.multi_reduction <add>, %6, %cst_17 [1] : vector<4x8x128xf32> to vector<4x128xf32>
    %60 = vector.shape_cast %59 : vector<4x128xf32> to vector<4x1x128xf32>
    %61 = arith.mulf %6, %6 : vector<4x8x128xf32>
    %cst_18 = arith.constant dense<0.000000e+00> : vector<4x128xf32>
    %62 = vector.multi_reduction <add>, %61, %cst_18 [1] : vector<4x8x128xf32> to vector<4x128xf32>
    %63 = vector.shape_cast %62 : vector<4x128xf32> to vector<4x1x128xf32>
    %cst_19 = arith.constant 0.124999993 : f32
    %64 = vector.broadcast %cst_19 : f32 to vector<4x1x128xf32>
    %65 = arith.mulf %60, %64 : vector<4x1x128xf32>
    %cst_20 = arith.constant 0.124999993 : f32
    %66 = vector.broadcast %cst_20 : f32 to vector<4x1x128xf32>
    %67 = arith.mulf %63, %66 : vector<4x1x128xf32>
    %68 = arith.mulf %65, %65 : vector<4x1x128xf32>
    %69 = arith.subf %67, %68 : vector<4x1x128xf32>
    %cst_21 = arith.constant 1.000000e-07 : f32
    %70 = vector.broadcast %cst_21 : f32 to vector<4x1x128xf32>
    %71 = arith.addf %69, %70 : vector<4x1x128xf32>
    %72 = tpu.reciprocal %71 : vector<4x1x128xf32> -> vector<4x1x128xf32>
    %cst_22 = arith.constant -5.000000e-01 : f32
    %73 = vector.broadcast %cst_22 : f32 to vector<4x1x128xf32>
    %74 = arith.mulf %73, %72 : vector<4x1x128xf32>
    %75 = math.log %71 : vector<4x1x128xf32>
    %cst_23 = arith.constant -5.000000e-01 : f32
    %76 = vector.broadcast %cst_23 : f32 to vector<4x1x128xf32>
    %77 = arith.mulf %76, %75 : vector<4x1x128xf32>
    %78 = vector.broadcast %65 : vector<4x1x128xf32> to vector<4x8x128xf32>
    %79 = arith.subf %6, %78 : vector<4x8x128xf32>
    %80 = arith.mulf %79, %79 : vector<4x8x128xf32>
    %81 = vector.broadcast %74 : vector<4x1x128xf32> to vector<4x8x128xf32>
    %82 = arith.mulf %80, %81 : vector<4x8x128xf32>
    %83 = vector.broadcast %77 : vector<4x1x128xf32> to vector<4x8x128xf32>
    %84 = arith.addf %82, %83 : vector<4x8x128xf32>
    %85 = arith.maximumf %32, %58 : vector<4x8x128xf32>
    %86 = arith.maximumf %85, %84 : vector<4x8x128xf32>
    %87 = arith.subf %32, %86 : vector<4x8x128xf32>
    %88 = math.exp %87 : vector<4x8x128xf32>
    %89 = arith.subf %58, %86 : vector<4x8x128xf32>
    %90 = math.exp %89 : vector<4x8x128xf32>
    %91 = arith.subf %84, %86 : vector<4x8x128xf32>
    %92 = math.exp %91 : vector<4x8x128xf32>
    %93 = arith.addf %88, %90 : vector<4x8x128xf32>
    %94 = arith.addf %93, %92 : vector<4x8x128xf32>
    %95 = tpu.reciprocal %94 : vector<4x8x128xf32> -> vector<4x8x128xf32>
    %96 = arith.mulf %88, %95 : vector<4x8x128xf32>
    %97 = arith.mulf %90, %95 : vector<4x8x128xf32>
    %98 = arith.mulf %92, %95 : vector<4x8x128xf32>
    %cst_24 = arith.constant dense<0.000000e+00> : vector<4x128xf32>
    %99 = vector.multi_reduction <add>, %96, %cst_24 [1] : vector<4x8x128xf32> to vector<4x128xf32>
    %100 = vector.shape_cast %99 : vector<4x128xf32> to vector<4x1x128xf32>
    %cst_25 = arith.constant 1.000000e-07 : f32
    %101 = vector.broadcast %cst_25 : f32 to vector<4x1x128xf32>
    %102 = arith.addf %100, %101 : vector<4x1x128xf32>
    %103 = tpu.reciprocal %102 : vector<4x1x128xf32> -> vector<4x1x128xf32>
    %104 = arith.mulf %96, %4 : vector<4x8x128xf32>
    %cst_26 = arith.constant dense<0.000000e+00> : vector<4x128xf32>
    %105 = vector.multi_reduction <add>, %104, %cst_26 [1] : vector<4x8x128xf32> to vector<4x128xf32>
    %106 = vector.shape_cast %105 : vector<4x128xf32> to vector<4x1x128xf32>
    %107 = arith.mulf %106, %103 : vector<4x1x128xf32>
    %cst_27 = arith.constant dense<0.000000e+00> : vector<4x128xf32>
    %108 = vector.multi_reduction <add>, %97, %cst_27 [1] : vector<4x8x128xf32> to vector<4x128xf32>
    %109 = vector.shape_cast %108 : vector<4x128xf32> to vector<4x1x128xf32>
    %cst_28 = arith.constant 1.000000e-07 : f32
    %110 = vector.broadcast %cst_28 : f32 to vector<4x1x128xf32>
    %111 = arith.addf %109, %110 : vector<4x1x128xf32>
    %112 = tpu.reciprocal %111 : vector<4x1x128xf32> -> vector<4x1x128xf32>
    %113 = arith.mulf %97, %5 : vector<4x8x128xf32>
    %cst_29 = arith.constant dense<0.000000e+00> : vector<4x128xf32>
    %114 = vector.multi_reduction <add>, %113, %cst_29 [1] : vector<4x8x128xf32> to vector<4x128xf32>
    %115 = vector.shape_cast %114 : vector<4x128xf32> to vector<4x1x128xf32>
    %116 = arith.mulf %115, %112 : vector<4x1x128xf32>
    %cst_30 = arith.constant dense<0.000000e+00> : vector<4x128xf32>
    %117 = vector.multi_reduction <add>, %98, %cst_30 [1] : vector<4x8x128xf32> to vector<4x128xf32>
    %118 = vector.shape_cast %117 : vector<4x128xf32> to vector<4x1x128xf32>
    %cst_31 = arith.constant 1.000000e-07 : f32
    %119 = vector.broadcast %cst_31 : f32 to vector<4x1x128xf32>
    %120 = arith.addf %118, %119 : vector<4x1x128xf32>
    %121 = tpu.reciprocal %120 : vector<4x1x128xf32> -> vector<4x1x128xf32>
    %122 = arith.mulf %98, %6 : vector<4x8x128xf32>
    %cst_32 = arith.constant dense<0.000000e+00> : vector<4x128xf32>
    %123 = vector.multi_reduction <add>, %122, %cst_32 [1] : vector<4x8x128xf32> to vector<4x128xf32>
    %124 = vector.shape_cast %123 : vector<4x128xf32> to vector<4x1x128xf32>
    %125 = arith.mulf %124, %121 : vector<4x1x128xf32>
    %126 = arith.mulf %104, %4 : vector<4x8x128xf32>
    %cst_33 = arith.constant dense<0.000000e+00> : vector<4x128xf32>
    %127 = vector.multi_reduction <add>, %126, %cst_33 [1] : vector<4x8x128xf32> to vector<4x128xf32>
    %128 = vector.shape_cast %127 : vector<4x128xf32> to vector<4x1x128xf32>
    %129 = arith.mulf %128, %103 : vector<4x1x128xf32>
    %130 = arith.mulf %107, %107 : vector<4x1x128xf32>
    %131 = arith.subf %129, %130 : vector<4x1x128xf32>
    %cst_34 = arith.constant 1.000000e-07 : f32
    %132 = vector.broadcast %cst_34 : f32 to vector<4x1x128xf32>
    %133 = arith.addf %131, %132 : vector<4x1x128xf32>
    %134 = tpu.reciprocal %133 : vector<4x1x128xf32> -> vector<4x1x128xf32>
    %cst_35 = arith.constant -5.000000e-01 : f32
    %135 = vector.broadcast %cst_35 : f32 to vector<4x1x128xf32>
    %136 = arith.mulf %135, %134 : vector<4x1x128xf32>
    %137 = math.log %102 : vector<4x1x128xf32>
    %138 = math.log %133 : vector<4x1x128xf32>
    %cst_36 = arith.constant 5.000000e-01 : f32
    %139 = vector.broadcast %cst_36 : f32 to vector<4x1x128xf32>
    %140 = arith.mulf %139, %138 : vector<4x1x128xf32>
    %141 = arith.subf %137, %140 : vector<4x1x128xf32>
    %142 = vector.broadcast %107 : vector<4x1x128xf32> to vector<4x8x128xf32>
    %143 = arith.subf %4, %142 : vector<4x8x128xf32>
    %144 = arith.mulf %143, %143 : vector<4x8x128xf32>
    %145 = vector.broadcast %136 : vector<4x1x128xf32> to vector<4x8x128xf32>
    %146 = arith.mulf %144, %145 : vector<4x8x128xf32>
    %147 = vector.broadcast %141 : vector<4x1x128xf32> to vector<4x8x128xf32>
    %148 = arith.addf %146, %147 : vector<4x8x128xf32>
    %149 = arith.mulf %113, %5 : vector<4x8x128xf32>
    %cst_37 = arith.constant dense<0.000000e+00> : vector<4x128xf32>
    %150 = vector.multi_reduction <add>, %149, %cst_37 [1] : vector<4x8x128xf32> to vector<4x128xf32>
    %151 = vector.shape_cast %150 : vector<4x128xf32> to vector<4x1x128xf32>
    %152 = arith.mulf %151, %112 : vector<4x1x128xf32>
    %153 = arith.mulf %116, %116 : vector<4x1x128xf32>
    %154 = arith.subf %152, %153 : vector<4x1x128xf32>
    %cst_38 = arith.constant 1.000000e-07 : f32
    %155 = vector.broadcast %cst_38 : f32 to vector<4x1x128xf32>
    %156 = arith.addf %154, %155 : vector<4x1x128xf32>
    %157 = tpu.reciprocal %156 : vector<4x1x128xf32> -> vector<4x1x128xf32>
    %cst_39 = arith.constant -5.000000e-01 : f32
    %158 = vector.broadcast %cst_39 : f32 to vector<4x1x128xf32>
    %159 = arith.mulf %158, %157 : vector<4x1x128xf32>
    %160 = math.log %111 : vector<4x1x128xf32>
    %161 = math.log %156 : vector<4x1x128xf32>
    %cst_40 = arith.constant 5.000000e-01 : f32
    %162 = vector.broadcast %cst_40 : f32 to vector<4x1x128xf32>
    %163 = arith.mulf %162, %161 : vector<4x1x128xf32>
    %164 = arith.subf %160, %163 : vector<4x1x128xf32>
    %165 = vector.broadcast %116 : vector<4x1x128xf32> to vector<4x8x128xf32>
    %166 = arith.subf %5, %165 : vector<4x8x128xf32>
    %167 = arith.mulf %166, %166 : vector<4x8x128xf32>
    %168 = vector.broadcast %159 : vector<4x1x128xf32> to vector<4x8x128xf32>
    %169 = arith.mulf %167, %168 : vector<4x8x128xf32>
    %170 = vector.broadcast %164 : vector<4x1x128xf32> to vector<4x8x128xf32>
    %171 = arith.addf %169, %170 : vector<4x8x128xf32>
    %172 = arith.mulf %122, %6 : vector<4x8x128xf32>
    %cst_41 = arith.constant dense<0.000000e+00> : vector<4x128xf32>
    %173 = vector.multi_reduction <add>, %172, %cst_41 [1] : vector<4x8x128xf32> to vector<4x128xf32>
    %174 = vector.shape_cast %173 : vector<4x128xf32> to vector<4x1x128xf32>
    %175 = arith.mulf %174, %121 : vector<4x1x128xf32>
    %176 = arith.mulf %125, %125 : vector<4x1x128xf32>
    %177 = arith.subf %175, %176 : vector<4x1x128xf32>
    %cst_42 = arith.constant 1.000000e-07 : f32
    %178 = vector.broadcast %cst_42 : f32 to vector<4x1x128xf32>
    %179 = arith.addf %177, %178 : vector<4x1x128xf32>
    %180 = tpu.reciprocal %179 : vector<4x1x128xf32> -> vector<4x1x128xf32>
    %cst_43 = arith.constant -5.000000e-01 : f32
    %181 = vector.broadcast %cst_43 : f32 to vector<4x1x128xf32>
    %182 = arith.mulf %181, %180 : vector<4x1x128xf32>
    %183 = math.log %120 : vector<4x1x128xf32>
    %184 = math.log %179 : vector<4x1x128xf32>
    %cst_44 = arith.constant 5.000000e-01 : f32
    %185 = vector.broadcast %cst_44 : f32 to vector<4x1x128xf32>
    %186 = arith.mulf %185, %184 : vector<4x1x128xf32>
    %187 = arith.subf %183, %186 : vector<4x1x128xf32>
    %188 = vector.broadcast %125 : vector<4x1x128xf32> to vector<4x8x128xf32>
    %189 = arith.subf %6, %188 : vector<4x8x128xf32>
    %190 = arith.mulf %189, %189 : vector<4x8x128xf32>
    %191 = vector.broadcast %182 : vector<4x1x128xf32> to vector<4x8x128xf32>
    %192 = arith.mulf %190, %191 : vector<4x8x128xf32>
    %193 = vector.broadcast %187 : vector<4x1x128xf32> to vector<4x8x128xf32>
    %194 = arith.addf %192, %193 : vector<4x8x128xf32>
    %195 = arith.maximumf %148, %171 : vector<4x8x128xf32>
    %196 = arith.maximumf %195, %194 : vector<4x8x128xf32>
    %197 = arith.subf %148, %196 : vector<4x8x128xf32>
    %198 = math.exp %197 : vector<4x8x128xf32>
    %199 = arith.subf %171, %196 : vector<4x8x128xf32>
    %200 = math.exp %199 : vector<4x8x128xf32>
    %201 = arith.subf %194, %196 : vector<4x8x128xf32>
    %202 = math.exp %201 : vector<4x8x128xf32>
    %203 = arith.addf %198, %200 : vector<4x8x128xf32>
    %204 = arith.addf %203, %202 : vector<4x8x128xf32>
    %205 = tpu.reciprocal %204 : vector<4x8x128xf32> -> vector<4x8x128xf32>
    %206 = arith.mulf %198, %205 : vector<4x8x128xf32>
    %207 = arith.mulf %200, %205 : vector<4x8x128xf32>
    %208 = arith.mulf %202, %205 : vector<4x8x128xf32>
    %cst_45 = arith.constant dense<0.000000e+00> : vector<4x128xf32>
    %209 = vector.multi_reduction <add>, %206, %cst_45 [1] : vector<4x8x128xf32> to vector<4x128xf32>
    %210 = vector.shape_cast %209 : vector<4x128xf32> to vector<4x1x128xf32>
    %cst_46 = arith.constant 1.000000e-07 : f32
    %211 = vector.broadcast %cst_46 : f32 to vector<4x1x128xf32>
    %212 = arith.addf %210, %211 : vector<4x1x128xf32>
    %213 = tpu.reciprocal %212 : vector<4x1x128xf32> -> vector<4x1x128xf32>
    %214 = arith.mulf %206, %4 : vector<4x8x128xf32>
    %cst_47 = arith.constant dense<0.000000e+00> : vector<4x128xf32>
    %215 = vector.multi_reduction <add>, %214, %cst_47 [1] : vector<4x8x128xf32> to vector<4x128xf32>
    %216 = vector.shape_cast %215 : vector<4x128xf32> to vector<4x1x128xf32>
    %217 = arith.mulf %216, %213 : vector<4x1x128xf32>
    %cst_48 = arith.constant dense<0.000000e+00> : vector<4x128xf32>
    %218 = vector.multi_reduction <add>, %207, %cst_48 [1] : vector<4x8x128xf32> to vector<4x128xf32>
    %219 = vector.shape_cast %218 : vector<4x128xf32> to vector<4x1x128xf32>
    %cst_49 = arith.constant 1.000000e-07 : f32
    %220 = vector.broadcast %cst_49 : f32 to vector<4x1x128xf32>
    %221 = arith.addf %219, %220 : vector<4x1x128xf32>
    %222 = tpu.reciprocal %221 : vector<4x1x128xf32> -> vector<4x1x128xf32>
    %223 = arith.mulf %207, %5 : vector<4x8x128xf32>
    %cst_50 = arith.constant dense<0.000000e+00> : vector<4x128xf32>
    %224 = vector.multi_reduction <add>, %223, %cst_50 [1] : vector<4x8x128xf32> to vector<4x128xf32>
    %225 = vector.shape_cast %224 : vector<4x128xf32> to vector<4x1x128xf32>
    %226 = arith.mulf %225, %222 : vector<4x1x128xf32>
    %cst_51 = arith.constant dense<0.000000e+00> : vector<4x128xf32>
    %227 = vector.multi_reduction <add>, %208, %cst_51 [1] : vector<4x8x128xf32> to vector<4x128xf32>
    %228 = vector.shape_cast %227 : vector<4x128xf32> to vector<4x1x128xf32>
    %cst_52 = arith.constant 1.000000e-07 : f32
    %229 = vector.broadcast %cst_52 : f32 to vector<4x1x128xf32>
    %230 = arith.addf %228, %229 : vector<4x1x128xf32>
    %231 = tpu.reciprocal %230 : vector<4x1x128xf32> -> vector<4x1x128xf32>
    %232 = arith.mulf %208, %6 : vector<4x8x128xf32>
    %cst_53 = arith.constant dense<0.000000e+00> : vector<4x128xf32>
    %233 = vector.multi_reduction <add>, %232, %cst_53 [1] : vector<4x8x128xf32> to vector<4x128xf32>
    %234 = vector.shape_cast %233 : vector<4x128xf32> to vector<4x1x128xf32>
    %235 = arith.mulf %234, %231 : vector<4x1x128xf32>
    %236 = vector.extract_strided_slice %217 {offsets = [0, 0, 0], sizes = [1, 1, 128], strides = [1, 1, 1]} : vector<4x1x128xf32> to vector<1x1x128xf32>
    %237 = vector.shape_cast %236 : vector<1x1x128xf32> to vector<1x128xf32>
    %c0_54 = arith.constant 0 : index
    %c0_55 = arith.constant 0 : index
    %238 = vector.load %arg3[%c0_54, %c0_55] : memref<12x1xf32, #tpu.memory_space<vmem>>, vector<1x1xf32>
    %239 = vector.broadcast %238 : vector<1x1xf32> to vector<1x128xf32>
    %240 = arith.addf %237, %239 : vector<1x128xf32>
    %c0_56 = arith.constant 0 : index
    %c0_57 = arith.constant 0 : index
    %241 = vector.load %arg4[%c0_56, %c0_57] : memref<12x128xf32, #tpu.memory_space<vmem>>, vector<1x128xf32>
    tpu.vector_store %arg4[%c0_56, %c0_57], %240 {strides = array<i32>} : memref<12x128xf32, #tpu.memory_space<vmem>>, vector<1x128xf32>,
    %242 = vector.extract_strided_slice %217 {offsets = [1, 0, 0], sizes = [1, 1, 128], strides = [1, 1, 1]} : vector<4x1x128xf32> to vector<1x1x128xf32>
    %243 = vector.shape_cast %242 : vector<1x1x128xf32> to vector<1x128xf32>
    %c1 = arith.constant 1 : index
    %c0_58 = arith.constant 0 : index
    %244 = vector.load %arg3[%c1, %c0_58] : memref<12x1xf32, #tpu.memory_space<vmem>>, vector<1x1xf32>
    %245 = vector.broadcast %244 : vector<1x1xf32> to vector<1x128xf32>
    %246 = arith.addf %243, %245 : vector<1x128xf32>
    %c1_59 = arith.constant 1 : index
    %c0_60 = arith.constant 0 : index
    %247 = vector.load %arg4[%c1_59, %c0_60] : memref<12x128xf32, #tpu.memory_space<vmem>>, vector<1x128xf32>
    tpu.vector_store %arg4[%c1_59, %c0_60], %246 {strides = array<i32>} : memref<12x128xf32, #tpu.memory_space<vmem>>, vector<1x128xf32>,
    %248 = vector.extract_strided_slice %217 {offsets = [2, 0, 0], sizes = [1, 1, 128], strides = [1, 1, 1]} : vector<4x1x128xf32> to vector<1x1x128xf32>
    %249 = vector.shape_cast %248 : vector<1x1x128xf32> to vector<1x128xf32>
    %c2 = arith.constant 2 : index
    %c0_61 = arith.constant 0 : index
    %250 = vector.load %arg3[%c2, %c0_61] : memref<12x1xf32, #tpu.memory_space<vmem>>, vector<1x1xf32>
    %251 = vector.broadcast %250 : vector<1x1xf32> to vector<1x128xf32>
    %252 = arith.addf %249, %251 : vector<1x128xf32>
    %c2_62 = arith.constant 2 : index
    %c0_63 = arith.constant 0 : index
    %253 = vector.load %arg4[%c2_62, %c0_63] : memref<12x128xf32, #tpu.memory_space<vmem>>, vector<1x128xf32>
    tpu.vector_store %arg4[%c2_62, %c0_63], %252 {strides = array<i32>} : memref<12x128xf32, #tpu.memory_space<vmem>>, vector<1x128xf32>,
    %254 = vector.extract_strided_slice %217 {offsets = [3, 0, 0], sizes = [1, 1, 128], strides = [1, 1, 1]} : vector<4x1x128xf32> to vector<1x1x128xf32>
    %255 = vector.shape_cast %254 : vector<1x1x128xf32> to vector<1x128xf32>
    %c3 = arith.constant 3 : index
    %c0_64 = arith.constant 0 : index
    %256 = vector.load %arg3[%c3, %c0_64] : memref<12x1xf32, #tpu.memory_space<vmem>>, vector<1x1xf32>
    %257 = vector.broadcast %256 : vector<1x1xf32> to vector<1x128xf32>
    %258 = arith.addf %255, %257 : vector<1x128xf32>
    %c3_65 = arith.constant 3 : index
    %c0_66 = arith.constant 0 : index
    %259 = vector.load %arg4[%c3_65, %c0_66] : memref<12x128xf32, #tpu.memory_space<vmem>>, vector<1x128xf32>
    tpu.vector_store %arg4[%c3_65, %c0_66], %258 {strides = array<i32>} : memref<12x128xf32, #tpu.memory_space<vmem>>, vector<1x128xf32>,
    %260 = vector.extract_strided_slice %226 {offsets = [0, 0, 0], sizes = [1, 1, 128], strides = [1, 1, 1]} : vector<4x1x128xf32> to vector<1x1x128xf32>
    %261 = vector.shape_cast %260 : vector<1x1x128xf32> to vector<1x128xf32>
    %c4 = arith.constant 4 : index
    %c0_67 = arith.constant 0 : index
    %262 = vector.load %arg3[%c4, %c0_67] : memref<12x1xf32, #tpu.memory_space<vmem>>, vector<1x1xf32>
    %263 = vector.broadcast %262 : vector<1x1xf32> to vector<1x128xf32>
    %264 = arith.addf %261, %263 : vector<1x128xf32>
    %c4_68 = arith.constant 4 : index
    %c0_69 = arith.constant 0 : index
    %265 = vector.load %arg4[%c4_68, %c0_69] : memref<12x128xf32, #tpu.memory_space<vmem>>, vector<1x128xf32>
    tpu.vector_store %arg4[%c4_68, %c0_69], %264 {strides = array<i32>} : memref<12x128xf32, #tpu.memory_space<vmem>>, vector<1x128xf32>,
    %266 = vector.extract_strided_slice %226 {offsets = [1, 0, 0], sizes = [1, 1, 128], strides = [1, 1, 1]} : vector<4x1x128xf32> to vector<1x1x128xf32>
    %267 = vector.shape_cast %266 : vector<1x1x128xf32> to vector<1x128xf32>
    %c5 = arith.constant 5 : index
    %c0_70 = arith.constant 0 : index
    %268 = vector.load %arg3[%c5, %c0_70] : memref<12x1xf32, #tpu.memory_space<vmem>>, vector<1x1xf32>
    %269 = vector.broadcast %268 : vector<1x1xf32> to vector<1x128xf32>
    %270 = arith.addf %267, %269 : vector<1x128xf32>
    %c5_71 = arith.constant 5 : index
    %c0_72 = arith.constant 0 : index
    %271 = vector.load %arg4[%c5_71, %c0_72] : memref<12x128xf32, #tpu.memory_space<vmem>>, vector<1x128xf32>
    tpu.vector_store %arg4[%c5_71, %c0_72], %270 {strides = array<i32>} : memref<12x128xf32, #tpu.memory_space<vmem>>, vector<1x128xf32>,
    %272 = vector.extract_strided_slice %226 {offsets = [2, 0, 0], sizes = [1, 1, 128], strides = [1, 1, 1]} : vector<4x1x128xf32> to vector<1x1x128xf32>
    %273 = vector.shape_cast %272 : vector<1x1x128xf32> to vector<1x128xf32>
    %c6 = arith.constant 6 : index
    %c0_73 = arith.constant 0 : index
    %274 = vector.load %arg3[%c6, %c0_73] : memref<12x1xf32, #tpu.memory_space<vmem>>, vector<1x1xf32>
    %275 = vector.broadcast %274 : vector<1x1xf32> to vector<1x128xf32>
    %276 = arith.addf %273, %275 : vector<1x128xf32>
    %c6_74 = arith.constant 6 : index
    %c0_75 = arith.constant 0 : index
    %277 = vector.load %arg4[%c6_74, %c0_75] : memref<12x128xf32, #tpu.memory_space<vmem>>, vector<1x128xf32>
    tpu.vector_store %arg4[%c6_74, %c0_75], %276 {strides = array<i32>} : memref<12x128xf32, #tpu.memory_space<vmem>>, vector<1x128xf32>,
    %278 = vector.extract_strided_slice %226 {offsets = [3, 0, 0], sizes = [1, 1, 128], strides = [1, 1, 1]} : vector<4x1x128xf32> to vector<1x1x128xf32>
    %279 = vector.shape_cast %278 : vector<1x1x128xf32> to vector<1x128xf32>
    %c7 = arith.constant 7 : index
    %c0_76 = arith.constant 0 : index
    %280 = vector.load %arg3[%c7, %c0_76] : memref<12x1xf32, #tpu.memory_space<vmem>>, vector<1x1xf32>
    %281 = vector.broadcast %280 : vector<1x1xf32> to vector<1x128xf32>
    %282 = arith.addf %279, %281 : vector<1x128xf32>
    %c7_77 = arith.constant 7 : index
    %c0_78 = arith.constant 0 : index
    %283 = vector.load %arg4[%c7_77, %c0_78] : memref<12x128xf32, #tpu.memory_space<vmem>>, vector<1x128xf32>
    tpu.vector_store %arg4[%c7_77, %c0_78], %282 {strides = array<i32>} : memref<12x128xf32, #tpu.memory_space<vmem>>, vector<1x128xf32>,
    %284 = vector.extract_strided_slice %235 {offsets = [0, 0, 0], sizes = [1, 1, 128], strides = [1, 1, 1]} : vector<4x1x128xf32> to vector<1x1x128xf32>
    %285 = vector.shape_cast %284 : vector<1x1x128xf32> to vector<1x128xf32>
    %c8 = arith.constant 8 : index
    %c0_79 = arith.constant 0 : index
    %286 = vector.load %arg3[%c8, %c0_79] : memref<12x1xf32, #tpu.memory_space<vmem>>, vector<1x1xf32>
    %287 = vector.broadcast %286 : vector<1x1xf32> to vector<1x128xf32>
    %288 = arith.addf %285, %287 : vector<1x128xf32>
    %c8_80 = arith.constant 8 : index
    %c0_81 = arith.constant 0 : index
    %289 = vector.load %arg4[%c8_80, %c0_81] : memref<12x128xf32, #tpu.memory_space<vmem>>, vector<1x128xf32>
    tpu.vector_store %arg4[%c8_80, %c0_81], %288 {strides = array<i32>} : memref<12x128xf32, #tpu.memory_space<vmem>>, vector<1x128xf32>,
    %290 = vector.extract_strided_slice %235 {offsets = [1, 0, 0], sizes = [1, 1, 128], strides = [1, 1, 1]} : vector<4x1x128xf32> to vector<1x1x128xf32>
    %291 = vector.shape_cast %290 : vector<1x1x128xf32> to vector<1x128xf32>
    %c9 = arith.constant 9 : index
    %c0_82 = arith.constant 0 : index
    %292 = vector.load %arg3[%c9, %c0_82] : memref<12x1xf32, #tpu.memory_space<vmem>>, vector<1x1xf32>
    %293 = vector.broadcast %292 : vector<1x1xf32> to vector<1x128xf32>
    %294 = arith.addf %291, %293 : vector<1x128xf32>
    %c9_83 = arith.constant 9 : index
    %c0_84 = arith.constant 0 : index
    %295 = vector.load %arg4[%c9_83, %c0_84] : memref<12x128xf32, #tpu.memory_space<vmem>>, vector<1x128xf32>
    tpu.vector_store %arg4[%c9_83, %c0_84], %294 {strides = array<i32>} : memref<12x128xf32, #tpu.memory_space<vmem>>, vector<1x128xf32>,
    %296 = vector.extract_strided_slice %235 {offsets = [2, 0, 0], sizes = [1, 1, 128], strides = [1, 1, 1]} : vector<4x1x128xf32> to vector<1x1x128xf32>
    %297 = vector.shape_cast %296 : vector<1x1x128xf32> to vector<1x128xf32>
    %c10 = arith.constant 10 : index
    %c0_85 = arith.constant 0 : index
    %298 = vector.load %arg3[%c10, %c0_85] : memref<12x1xf32, #tpu.memory_space<vmem>>, vector<1x1xf32>
    %299 = vector.broadcast %298 : vector<1x1xf32> to vector<1x128xf32>
    %300 = arith.addf %297, %299 : vector<1x128xf32>
    %c10_86 = arith.constant 10 : index
    %c0_87 = arith.constant 0 : index
    %301 = vector.load %arg4[%c10_86, %c0_87] : memref<12x128xf32, #tpu.memory_space<vmem>>, vector<1x128xf32>
    tpu.vector_store %arg4[%c10_86, %c0_87], %300 {strides = array<i32>} : memref<12x128xf32, #tpu.memory_space<vmem>>, vector<1x128xf32>,
    %302 = vector.extract_strided_slice %235 {offsets = [3, 0, 0], sizes = [1, 1, 128], strides = [1, 1, 1]} : vector<4x1x128xf32> to vector<1x1x128xf32>
    %303 = vector.shape_cast %302 : vector<1x1x128xf32> to vector<1x128xf32>
    %c11 = arith.constant 11 : index
    %c0_88 = arith.constant 0 : index
    %304 = vector.load %arg3[%c11, %c0_88] : memref<12x1xf32, #tpu.memory_space<vmem>>, vector<1x1xf32>
    %305 = vector.broadcast %304 : vector<1x1xf32> to vector<1x128xf32>
    %306 = arith.addf %303, %305 : vector<1x128xf32>
    %c11_89 = arith.constant 11 : index
    %c0_90 = arith.constant 0 : index
    %307 = vector.load %arg4[%c11_89, %c0_90] : memref<12x128xf32, #tpu.memory_space<vmem>>, vector<1x128xf32>
    tpu.vector_store %arg4[%c11_89, %c0_90], %306 {strides = array<i32>} : memref<12x128xf32, #tpu.memory_space<vmem>>, vector<1x128xf32>,
    return
  }
  func.func @transform_0(%arg0: i32) -> (i32, i32) {
    %c0_i32 = arith.constant 0 : i32
    %c0_i32_0 = arith.constant 0 : i32
    %c0_i32_1 = arith.constant 0 : i32
    return %c0_i32, %c0_i32_0 : i32, i32
  }
  func.func @transform_1(%arg0: i32) -> (i32, i32) {
    %c0_i32 = arith.constant 0 : i32
    %c0_i32_0 = arith.constant 0 : i32
    return %c0_i32, %arg0 : i32, i32
  }
  func.func @transform_2(%arg0: i32) -> (i32, i32) {
    %c0_i32 = arith.constant 0 : i32
    %c0_i32_0 = arith.constant 0 : i32
    %c0_i32_1 = arith.constant 0 : i32
    return %c0_i32, %c0_i32_0 : i32, i32
  }
  func.func @transform_3(%arg0: i32) -> (i32, i32) {
    %c0_i32 = arith.constant 0 : i32
    %c0_i32_0 = arith.constant 0 : i32
    return %c0_i32, %arg0 : i32, i32
  }
}

</mosaic_0001>

<llo_original>
// kernel: tpu_custom_call.1
$region0: #{tpu_custom_call.1}
  #allocation0 [shape = 'u32[]', space=smem, size = 0x4, offset = 0x4, fixed_abs, tag = 'smem constant byte address 0x4 - core index']
  #allocation1 [shape = 'u32[144,128]{1,0:T(1,128)}', space=vmem, size = 0x12000, scoped, tag = 'internal scratch']
  %s0 = inlined_call_operand.vmem [shape: f32[96,32], index: 0, kind: input, shape index: {}]
  %s1 = inlined_call_operand.vmem [shape: f32[32,256], index: 1, kind: input, shape index: {}]
  %s2 = inlined_call_operand.vmem [shape: f32[12,1], index: 2, kind: input, shape index: {}]
  %s3 = inlined_call_operand.hbm [shape: f32[12,256], index: 3, kind: output, shape index: {}]
  %s4 = sld [smem:[#allocation0]]
  $region83: #{tpu_custom_call.1} parent=0
    _
  %s6 = ssub.s32 1, %s4
  %s7 = scalar_select 0, %s6, %s4
  $region1: #{tpu_custom_call.1} parent=0
    #allocation2 [shape = 'u8[32768]{0}', space=vmem, size = 0x8000, scoped, tag = 'input window, operand 1']
    #allocation3 [shape = 'u8[16384]{0}', space=vmem, size = 0x4000, scoped, tag = 'output window, operand 0']
    #allocation4 [shape = 's32[2]{0}', space=sflag, size = 0x8, scoped, tag = 'scoped memory for tpu_custom_call.1']
    %8 = vsyncpa [#allocation4], 0
    %s9 = scalar_lea.sflag [#allocation4], 1
    %10 = vsyncpa %s9, 0
    loop: start=0, step=1, limit=4
    $region2: #{tpu_custom_call.1} parent=1 // loop_pre_header
      _
    $region3: #{tpu_custom_call.1} parent=1 // loop_header
      %s12 = sphi 0, %s16
      %p13 = scmp.ge.s32.totalorder %s12, 4
      %s20 = sphi 0, %s20
      %s22 = sphi 0, %s20
      %s23 = sphi 0, %s22
      %s37 = sphi 0, %s23
      %s43 = sphi 0, %s45
      %s46 = sphi 0, %s43
      %s47 = sphi 0, %s46
      %s63 = sphi 0, %s47
      %s67 = sphi 0, %s67
      %s69 = sphi 0, %s67
      %s70 = sphi 0, %s69
      %s84 = sphi 0, %s70
      %s90 = sphi 0, %s92
      %s93 = sphi 0, %s90
      %s94 = sphi 0, %s93
      %s110 = sphi 0, %s94
    $region4: #{tpu_custom_call.1} parent=1 // loop_header_branch
      %15 = sbr.rel (%p13) target = $region8
    $region5: #{tpu_custom_call.1} parent=1 // loop_body
      %s17 = ssub.s32 %s12, 1
      %s18 = ssub.s32 %s12, 2
      %s19 = sadd.s32 %s12, 1
      %s21 = sadd.s32 %s20, 1
      %p24 = scmp.eq.s32.totalorder %s12, 1
      %p25 = scmp.ne.s32.totalorder %s20, %s22
      %p26 = scmp.eq.s32.totalorder %s12, 0
      %p27 = por %p25, %p26
      %p28 = scmp.ne.s32.totalorder %s20, %s22
      %p29 = scmp.eq.s32.totalorder %s17, 1
      %p30 = por %p28, %p29
      %p31 = scmp.ne.s32.totalorder %s22, %s23
      %p32 = scmp.eq.s32.totalorder %s17, 0
      %p33 = por %p31, %p32
      %p34 = scmp.ne.s32.totalorder %s22, %s23
      %p35 = scmp.eq.s32.totalorder %s18, 1
      %p36 = por %p34, %p35
      %p38 = scmp.ne.s32.totalorder %s23, %s37
      %p39 = scmp.eq.s32.totalorder %s18, 0
      %p40 = por %p38, %p39
      %s41 = ssub.s32 %s12, %s19
      %p42 = scmp.eq.s32.totalorder %s41, 0
      %s44 = sadd.s32 %s43, 1
      %s45 = scalar_select %p42, %s43, %s44
      %p48 = pneg %p42
      %p49 = scmp.eq.s32.totalorder %s12, 1
      %p50 = por %p48, %p49
      %p51 = scmp.ne.s32.totalorder %s43, %s46
      %p52 = scmp.eq.s32.totalorder %s12, 0
      %p53 = por %p51, %p52
      %p54 = scmp.ne.s32.totalorder %s43, %s46
      %p55 = scmp.eq.s32.totalorder %s17, 1
      %p56 = por %p54, %p55
      %p57 = scmp.ne.s32.totalorder %s46, %s47
      %p58 = scmp.eq.s32.totalorder %s17, 0
      %p59 = por %p57, %p58
      %p60 = scmp.ne.s32.totalorder %s46, %s47
      %p61 = scmp.eq.s32.totalorder %s18, 1
      %p62 = por %p60, %p61
      %p64 = scmp.ne.s32.totalorder %s47, %s63
      %p65 = scmp.eq.s32.totalorder %s18, 0
      %p66 = por %p64, %p65
      %s68 = sadd.s32 %s67, 1
      %p71 = scmp.eq.s32.totalorder %s12, 1
      %p72 = scmp.ne.s32.totalorder %s67, %s69
      %p73 = scmp.eq.s32.totalorder %s12, 0
      %p74 = por %p72, %p73
      %p75 = scmp.ne.s32.totalorder %s67, %s69
      %p76 = scmp.eq.s32.totalorder %s17, 1
      %p77 = por %p75, %p76
      %p78 = scmp.ne.s32.totalorder %s69, %s70
      %p79 = scmp.eq.s32.totalorder %s17, 0
      %p80 = por %p78, %p79
      %p81 = scmp.ne.s32.totalorder %s69, %s70
      %p82 = scmp.eq.s32.totalorder %s18, 1
      %p83 = por %p81, %p82
      %p85 = scmp.ne.s32.totalorder %s70, %s84
      %p86 = scmp.eq.s32.totalorder %s18, 0
      %p87 = por %p85, %p86
      %s88 = ssub.s32 %s12, %s19
      %p89 = scmp.eq.s32.totalorder %s88, 0
      %s91 = sadd.s32 %s90, 1
      %s92 = scalar_select %p89, %s90, %s91
      %p95 = pneg %p89
      %p96 = scmp.eq.s32.totalorder %s12, 1
      %p97 = por %p95, %p96
      %p98 = scmp.ne.s32.totalorder %s90, %s93
      %p99 = scmp.eq.s32.totalorder %s12, 0
      %p100 = por %p98, %p99
      %p101 = scmp.ne.s32.totalorder %s90, %s93
      %p102 = scmp.eq.s32.totalorder %s17, 1
      %p103 = por %p101, %p102
      %p104 = scmp.ne.s32.totalorder %s93, %s94
      %p105 = scmp.eq.s32.totalorder %s17, 0
      %p106 = por %p104, %p105
      %p107 = scmp.ne.s32.totalorder %s93, %s94
      %p108 = scmp.eq.s32.totalorder %s18, 1
      %p109 = por %p107, %p108
      %p111 = scmp.ne.s32.totalorder %s94, %s110
      %p112 = scmp.eq.s32.totalorder %s18, 0
      %p113 = por %p111, %p112
      %p114 = scmp.le.s32.totalorder 1, %s12
      %p115 = scmp.lt.s32.totalorder %s12, 3
      %p116 = pnand %p114, %p115
      %p117 = pneg %p116
      // Predicated region
      $region9: #{tpu_custom_call.1} parent=5 // pred_check
        _
      $region10: #{tpu_custom_call.1} parent=5 // pred_check_branch
        %119 = sbr.rel (%p116) target = $region12
      $region11: #{tpu_custom_call.1} parent=5 // pred_region
        %s120 = ssub.s32 %s12, 1
        // Predicated region
        $region13: #{tpu_custom_call.1} parent=11 // pred_check
          %p121 = pneg %p33
        $region14: #{tpu_custom_call.1} parent=11 // pred_check_branch
          %123 = sbr.rel (%p121) target = $region16
        $region15: #{tpu_custom_call.1} parent=11 // pred_region
          _
        $region16: #{tpu_custom_call.1} parent=11 // pred_fallthru
          _
        // Predicated region
        $region17: #{tpu_custom_call.1} parent=11 // pred_check
          %p124 = pneg %p80
        $region18: #{tpu_custom_call.1} parent=11 // pred_check_branch
          %126 = sbr.rel (%p124) target = $region20
        $region19: #{tpu_custom_call.1} parent=11 // pred_region
          _
        $region20: #{tpu_custom_call.1} parent=11 // pred_fallthru
          _
      $region12: #{tpu_custom_call.1} parent=5 // pred_fallthru
        _
      %p127 = scmp.lt.s32.totalorder %s12, 2
      // Predicated region
      $region21: #{tpu_custom_call.1} parent=5 // pred_check
        %p128 = pneg %p127
      $region22: #{tpu_custom_call.1} parent=5 // pred_check_branch
        %130 = sbr.rel (%p128) target = $region24
      $region23: #{tpu_custom_call.1} parent=5 // pred_region
        // Predicated region
        $region25: #{tpu_custom_call.1} parent=23 // pred_check
          %p131 = pneg %p53
        $region26: #{tpu_custom_call.1} parent=23 // pred_check_branch
          %133 = sbr.rel (%p131) target = $region28
        $region27: #{tpu_custom_call.1} parent=23 // pred_region
          %s134 = sand.u32 %s43, 1
          %s135 = sand.u32 %s43, 1
          %s136 = smul.addr %s135, 32
          %s137 = scalar_lea.vmem [#allocation2], %s136
          %s138 = smul.addr %s12, 8
          %s139 = scalar_lea.vmem %s1, %s138
          // Predicated region
          $region29: #{tpu_custom_call.1} parent=27 // pred_check
            _
          $region30: #{tpu_custom_call.1} parent=27 // pred_check_branch
            %141 = sbr.rel (0) target = $region32
          $region31: #{tpu_custom_call.1} parent=27 // pred_region
            // Predicated region
            $region33: #{tpu_custom_call.1} parent=31 // pred_check
              _
            $region34: #{tpu_custom_call.1} parent=31 // pred_check_branch
              %143 = sbr.rel (0) target = $region36
            $region35: #{tpu_custom_call.1} parent=31 // pred_region
              // Predicated region
              $region48: #{tpu_custom_call.1} parent=35 // pred_check
                _
              $region49: #{tpu_custom_call.1} parent=35 // pred_check_branch
                %164 = sbr.rel (0) target = $region51
              $region50: #{tpu_custom_call.1} parent=35 // pred_region
                loop: start=0, step=1, limit=1
                $region52: #{tpu_custom_call.1} parent=50 // loop_pre_header
                  _
                $region53: #{tpu_custom_call.1} parent=50 // loop_header
                  %s166 = sphi 0, %s170
                  %p167 = scmp.ge.s32.totalorder %s166, 1
                  %s171 = sphi %s139, %s139
                  %s172 = sphi %s137, %s137
                $region54: #{tpu_custom_call.1} parent=50 // loop_header_branch
                  %169 = sbr.rel (%p167) target = $region58
                $region55: #{tpu_custom_call.1} parent=50 // loop_body
                  %v173 = vld [vmem:[%s171] sm:$0xff]
                  %174 = vst [vmem:[%s172] sm:$0xff] %v173
                  %v175 = vld [vmem:[%s171 + $0x10] sm:$0xff]
                  %176 = vst [vmem:[%s172 + $0x8] sm:$0xff] %v175
                  %v177 = vld [vmem:[%s171 + $0x20] sm:$0xff]
                  %178 = vst [vmem:[%s172 + $0x10] sm:$0xff] %v177
                  %v179 = vld [vmem:[%s171 + $0x30] sm:$0xff]
                  %180 = vst [vmem:[%s172 + $0x18] sm:$0xff] %v179
                $region56: #{tpu_custom_call.1} parent=50 // loop_footer
                  %s170 = sadd.s32 1, %s166
                $region57: #{tpu_custom_call.1} parent=50 // loop_footer_branch
                  %165 = sbr.rel target = $region53
                $region58: #{tpu_custom_call.1} parent=50 // loop_exit
                  _
              $region51: #{tpu_custom_call.1} parent=35 // pred_fallthru
                _
              // Predicated region
              $region59: #{tpu_custom_call.1} parent=35 // pred_check
                _
              $region60: #{tpu_custom_call.1} parent=35 // pred_check_branch
                %182 = sbr.rel target = $region62
              $region61: #{tpu_custom_call.1} parent=35 // pred_region
                _
              $region62: #{tpu_custom_call.1} parent=35 // pred_fallthru
                _
            $region36: #{tpu_custom_call.1} parent=31 // pred_fallthru
              _
            // Predicated region
            $region37: #{tpu_custom_call.1} parent=31 // pred_check
              _
            $region38: #{tpu_custom_call.1} parent=31 // pred_check_branch
              %145 = sbr.rel target = $region40
            $region39: #{tpu_custom_call.1} parent=31 // pred_region
              loop: start=0, step=1, limit=1
              $region41: #{tpu_custom_call.1} parent=39 // loop_pre_header
                _
              $region42: #{tpu_custom_call.1} parent=39 // loop_header
                %s148 = sphi 0, %s152
                %p149 = scmp.ge.s32.totalorder %s148, 1
                %s153 = sphi %s139, %s139
                %s154 = sphi %s137, %s137
              $region43: #{tpu_custom_call.1} parent=39 // loop_header_branch
                %151 = sbr.rel (%p149) target = $region47
              $region44: #{tpu_custom_call.1} parent=39 // loop_body
                %v155 = vld [vmem:[%s153] sm:$0xff]
                %156 = vst [vmem:[%s154] sm:$0xff] %v155
                %v157 = vld [vmem:[%s153 + $0x10] sm:$0xff]
                %158 = vst [vmem:[%s154 + $0x8] sm:$0xff] %v157
                %v159 = vld [vmem:[%s153 + $0x20] sm:$0xff]
                %160 = vst [vmem:[%s154 + $0x10] sm:$0xff] %v159
                %v161 = vld [vmem:[%s153 + $0x30] sm:$0xff]
                %162 = vst [vmem:[%s154 + $0x18] sm:$0xff] %v161
              $region45: #{tpu_custom_call.1} parent=39 // loop_footer
                %s152 = sadd.s32 1, %s148
              $region46: #{tpu_custom_call.1} parent=39 // loop_footer_branch
                %147 = sbr.rel target = $region42
              $region47: #{tpu_custom_call.1} parent=39 // loop_exit
                _
            $region40: #{tpu_custom_call.1} parent=31 // pred_fallthru
              _
          $region32: #{tpu_custom_call.1} parent=27 // pred_fallthru
            _
          %183 = vnop
        $region28: #{tpu_custom_call.1} parent=23 // pred_fallthru
          _
      $region24: #{tpu_custom_call.1} parent=5 // pred_fallthru
        _
      %p184 = scmp.le.s32.totalorder 1, %s12
      %p185 = scmp.lt.s32.totalorder %s12, 3
      %p186 = pnand %p184, %p185
      %p187 = pneg %p186
      // Predicated region
      $region63: #{tpu_custom_call.1} parent=5 // pred_check
        _
      $region64: #{tpu_custom_call.1} parent=5 // pred_check_branch
        %189 = sbr.rel (%p186) target = $region66
      $region65: #{tpu_custom_call.1} parent=5 // pred_region
        %s190 = ssub.s32 %s12, 1
        %s191 = sand.u32 %s46, 1
        %s192 = sand.u32 %s46, 1
        %s193 = smul.addr %s192, 32
        %s194 = scalar_lea.vmem [#allocation2], %s193
        // Predicated region
        $region67: #{tpu_custom_call.1} parent=65 // pred_check
          %p195 = pneg %p59
        $region68: #{tpu_custom_call.1} parent=65 // pred_check_branch
          %197 = sbr.rel (%p195) target = $region70
        $region69: #{tpu_custom_call.1} parent=65 // pred_region
          _
        $region70: #{tpu_custom_call.1} parent=65 // pred_fallthru
          _
        %p198 = pneg %p33
        %p199 = pneg %p30
        %s200 = sand.u32 %s46, 1
        %s201 = sand.u32 %s46, 1
        %s202 = smul.addr %s201, 32
        %s203 = scalar_lea.vmem [#allocation2], %s202
        %p204 = pneg %p59
        %p205 = pneg %p56
        %p206 = pneg %p80
        %p207 = pneg %p77
        %p208 = pneg %p106
        %p209 = pneg %p103
        %s210 = sand.u32 %s93, 1
        %s211 = scalar_lea.sflag [#allocation4], %s210
        %s212 = sand.u32 %s93, 1
        %s213 = smul.addr %s212, 16
        %s214 = scalar_lea.vmem [#allocation3], %s213
        %v215 = vld [vmem:[%s0] sm:$0xff]
        %v216 = vld [vmem:[%s0 + $0x8] sm:$0xff]
        %v217 = vld [vmem:[%s0 + $0x10] sm:$0xff]
        %v218 = vld [vmem:[%s0 + $0x18] sm:$0xff]
        %v219 = vld [vmem:[%s0 + $0x20] sm:$0xff]
        %v220 = vld [vmem:[%s0 + $0x28] sm:$0xff]
        %v221 = vld [vmem:[%s0 + $0x30] sm:$0xff]
        %v222 = vld [vmem:[%s0 + $0x38] sm:$0xff]
        %v223 = vld [vmem:[%s0 + $0x40] sm:$0xff]
        %v224 = vld [vmem:[%s0 + $0x48] sm:$0xff]
        %v225 = vld [vmem:[%s0 + $0x50] sm:$0xff]
        %v226 = vld [vmem:[%s0 + $0x58] sm:$0xff]
        %v227 = vld [vmem:[%s194] sm:$0xff]
        %v228 = vld [vmem:[%s194 + $0x8] sm:$0xff]
        %v229 = vld [vmem:[%s194 + $0x10] sm:$0xff]
        %v230 = vld [vmem:[%s194 + $0x18] sm:$0xff]
        %vm231 = vcmask 261120
        %v233 = vsel %vm231, %v215, 0
        %v236 = vsel %vm231, %v216, 0
        %v239 = vsel %vm231, %v217, 0
        %v242 = vsel %vm231, %v218, 0
        %v245 = vsel %vm231, %v219, 0
        %v248 = vsel %vm231, %v220, 0
        %v251 = vsel %vm231, %v221, 0
        %v254 = vsel %vm231, %v222, 0
        %v257 = vsel %vm231, %v223, 0
        %v260 = vsel %vm231, %v224, 0
        %v263 = vsel %vm231, %v225, 0
        %v266 = vsel %vm231, %v226, 0
        %268 = vmatprep.subr.mxu0 0.0
        %269 = vmatpush1.msra.mxu0 %v227
        %270 = vmatprep.subr.mxu0 0.0
        %271 = vmatpush1.msra.mxu0 %v228
        %272 = vmatprep.subr.mxu0 0.0
        %273 = vmatpush1.msra.mxu0 %v229
        %274 = vmatprep.subr.mxu0 0.0
        %275 = vmatpush1.msra.mxu0 %v230
        %276 = vmatprep.subr.mxu0 0.0
        %277 = vmatpush1.msra.mxu0 0.0
        %278 = vmatprep.subr.mxu0 0.0
        %279 = vmatpush1.msra.mxu0 0.0
        %280 = vmatprep.subr.mxu0 0.0
        %281 = vmatpush1.msra.mxu0 0.0
        %282 = vmatprep.subr.mxu0 0.0
        %283 = vmatpush1.msra.mxu0 0.0
        %284 = vmatprep.subr.mxu0 0.0
        %285 = vmatpush1.msra.mxu0 0.0
        %286 = vmatprep.subr.mxu0 0.0
        %287 = vmatpush1.msra.mxu0 0.0
        %288 = vmatprep.subr.mxu0 0.0
        %289 = vmatpush1.msra.mxu0 0.0
        %290 = vmatprep.subr.mxu0 0.0
        %291 = vmatpush1.msra.mxu0 0.0
        %292 = vmatprep.subr.mxu0 0.0
        %293 = vmatpush1.msra.mxu0 0.0
        %294 = vmatprep.subr.mxu0 0.0
        %295 = vmatpush1.msra.mxu0 0.0
        %296 = vmatprep.subr.mxu0 0.0
        %297 = vmatpush1.msra.mxu0 0.0
        %298 = vmatprep.subr.mxu0 0.0
        %299 = vmatpush1.msra.mxu0 0.0
        %300 = vmatprep.subr.mxu0 0.0
        %301 = vmatpush1.msra.mxu0 0.0
        %302 = vmatprep.subr.mxu0 0.0
        %303 = vmatpush1.msra.mxu0 0.0
        %304 = vmatprep.subr.mxu0 0.0
        %305 = vmatpush1.msra.mxu0 0.0
        %306 = vmatprep.subr.mxu0 0.0
        %307 = vmatpush1.msra.mxu0 0.0
        %308 = vmatprep.subr.mxu0 0.0
        %309 = vmatpush1.msra.mxu0 0.0
        %310 = vmatprep.subr.mxu0 0.0
        %311 = vmatpush1.msra.mxu0 0.0
        %312 = vmatprep.subr.mxu0 0.0
        %313 = vmatpush1.msra.mxu0 0.0
        %314 = vmatprep.subr.mxu0 0.0
        %315 = vmatpush1.msra.mxu0 0.0
        %316 = vmatprep.subr.mxu0 0.0
        %317 = vmatpush1.msra.mxu0 0.0
        %318 = vmatprep.subr.mxu0 0.0
        %319 = vmatpush1.msra.mxu0 0.0
        %320 = vmatprep.subr.mxu0 0.0
        %321 = vmatpush1.msra.mxu0 0.0
        %322 = vmatprep.subr.mxu0 0.0
        %323 = vmatpush1.msra.mxu0 0.0
        %324 = vmatprep.subr.mxu0 0.0
        %325 = vmatpush1.msra.mxu0 0.0
        %326 = vmatprep.subr.mxu0 0.0
        %327 = vmatpush1.msra.mxu0 0.0
        %328 = vmatprep.subr.mxu0 0.0
        %329 = vmatpush1.msra.mxu0 0.0
        %330 = vmatprep.subr.mxu0 0.0
        %331 = vmatpush1.msra.mxu0 0.0
        %332 = vmatprep.mubr.f32.mxu0 0.0
        %333 = vmatmul.mubr.f32.gmra.mrb[0].mxu0 %v233
        %v334 = vpop.f32.mrb[0].mxu0
        %v335 = vadd.f32 0.0, %v334
        %v336 = vpop.f32.mrb[0].mxu0
        %337 = vmatprep.mubr.f32.mxu0 0.0
        %338 = vmatmul.mubr.f32.gmra.mrb[0].mxu0 %v236
        %v339 = vpop.f32.mrb[0].mxu0
        %v340 = vadd.f32 0.0, %v339
        %v341 = vpop.f32.mrb[0].mxu0
        %342 = vmatprep.mubr.f32.mxu0 0.0
        %343 = vmatmul.mubr.f32.gmra.mrb[0].mxu0 %v239
        %v344 = vpop.f32.mrb[0].mxu0
        %v345 = vadd.f32 0.0, %v344
        %v346 = vpop.f32.mrb[0].mxu0
        %347 = vmatprep.mubr.f32.mxu0 0.0
        %348 = vmatmul.mubr.f32.gmra.mrb[0].mxu0 %v242
        %v349 = vpop.f32.mrb[0].mxu0
        %v350 = vadd.f32 0.0, %v349
        %v351 = vpop.f32.mrb[0].mxu0
        %352 = vmatprep.mubr.f32.mxu0 0.0
        %353 = vmatmul.mubr.f32.gmra.mrb[0].mxu0 %v245
        %v354 = vpop.f32.mrb[0].mxu0
        %v355 = vadd.f32 0.0, %v354
        %v356 = vpop.f32.mrb[0].mxu0
        %357 = vmatprep.mubr.f32.mxu0 0.0
        %358 = vmatmul.mubr.f32.gmra.mrb[0].mxu0 %v248
        %v359 = vpop.f32.mrb[0].mxu0
        %v360 = vadd.f32 0.0, %v359
        %v361 = vpop.f32.mrb[0].mxu0
        %362 = vmatprep.mubr.f32.mxu0 0.0
        %363 = vmatmul.mubr.f32.gmra.mrb[0].mxu0 %v251
        %v364 = vpop.f32.mrb[0].mxu0
        %v365 = vadd.f32 0.0, %v364
        %v366 = vpop.f32.mrb[0].mxu0
        %367 = vmatprep.mubr.f32.mxu0 0.0
        %368 = vmatmul.mubr.f32.gmra.mrb[0].mxu0 %v254
        %v369 = vpop.f32.mrb[0].mxu0
        %v370 = vadd.f32 0.0, %v369
        %v371 = vpop.f32.mrb[0].mxu0
        %372 = vmatprep.mubr.f32.mxu0 0.0
        %373 = vmatmul.mubr.f32.gmra.mrb[0].mxu0 %v257
        %v374 = vpop.f32.mrb[0].mxu0
        %v375 = vadd.f32 0.0, %v374
        %v376 = vpop.f32.mrb[0].mxu0
        %377 = vmatprep.mubr.f32.mxu0 0.0
        %378 = vmatmul.mubr.f32.gmra.mrb[0].mxu0 %v260
        %v379 = vpop.f32.mrb[0].mxu0
        %v380 = vadd.f32 0.0, %v379
        %v381 = vpop.f32.mrb[0].mxu0
        %382 = vmatprep.mubr.f32.mxu0 0.0
        %383 = vmatmul.mubr.f32.gmra.mrb[0].mxu0 %v263
        %v384 = vpop.f32.mrb[0].mxu0
        %v385 = vadd.f32 0.0, %v384
        %v386 = vpop.f32.mrb[0].mxu0
        %387 = vmatprep.mubr.f32.mxu0 0.0
        %388 = vmatmul.mubr.f32.gmra.mrb[0].mxu0 %v266
        %v389 = vpop.f32.mrb[0].mxu0
        %v390 = vadd.f32 0.0, %v389
        %v391 = vpop.f32.mrb[0].mxu0
        %392 = vdwg.mxu0
        %v393 = vrot.slane %v335, 4
        %v394 = vadd.f32 %v335, %v393
        %v395 = vrot.slane %v394, 2
        %v396 = vadd.f32 %v394, %v395
        %v397 = vrot.slane %v396, 1
        %v398 = vadd.f32 %v396, %v397
        %v399 = vrot.slane %v340, 4
        %v400 = vadd.f32 %v340, %v399
        %v401 = vrot.slane %v400, 2
        %v402 = vadd.f32 %v400, %v401
        %v403 = vrot.slane %v402, 1
        %v404 = vadd.f32 %v402, %v403
        %v405 = vrot.slane %v345, 4
        %v406 = vadd.f32 %v345, %v405
        %v407 = vrot.slane %v406, 2
        %v408 = vadd.f32 %v406, %v407
        %v409 = vrot.slane %v408, 1
        %v410 = vadd.f32 %v408, %v409
        %v411 = vrot.slane %v350, 4
        %v412 = vadd.f32 %v350, %v411
        %v413 = vrot.slane %v412, 2
        %v414 = vadd.f32 %v412, %v413
        %v415 = vrot.slane %v414, 1
        %v416 = vadd.f32 %v414, %v415
        %v417 = vmul.f32 %v335, %v335
        %v418 = vmul.f32 %v340, %v340
        %v419 = vmul.f32 %v345, %v345
        %v420 = vmul.f32 %v350, %v350
        %v421 = vrot.slane %v417, 4
        %v422 = vadd.f32 %v417, %v421
        %v423 = vrot.slane %v422, 2
        %v424 = vadd.f32 %v422, %v423
        %v425 = vrot.slane %v424, 1
        %v426 = vadd.f32 %v424, %v425
        %v427 = vrot.slane %v418, 4
        %v428 = vadd.f32 %v418, %v427
        %v429 = vrot.slane %v428, 2
        %v430 = vadd.f32 %v428, %v429
        %v431 = vrot.slane %v430, 1
        %v432 = vadd.f32 %v430, %v431
        %v433 = vrot.slane %v419, 4
        %v434 = vadd.f32 %v419, %v433
        %v435 = vrot.slane %v434, 2
        %v436 = vadd.f32 %v434, %v435
        %v437 = vrot.slane %v436, 1
        %v438 = vadd.f32 %v436, %v437
        %v439 = vrot.slane %v420, 4
        %v440 = vadd.f32 %v420, %v439
        %v441 = vrot.slane %v440, 2
        %v442 = vadd.f32 %v440, %v441
        %v443 = vrot.slane %v442, 1
        %v444 = vadd.f32 %v442, %v443
        %v445 = vmul.f32 %v398, 0.12499999
        %v446 = vmul.f32 %v404, 0.12499999
        %v447 = vmul.f32 %v410, 0.12499999
        %v448 = vmul.f32 %v416, 0.12499999
        %v449 = vmul.f32 %v426, 0.12499999
        %v450 = vmul.f32 %v432, 0.12499999
        %v451 = vmul.f32 %v438, 0.12499999
        %v452 = vmul.f32 %v444, 0.12499999
        %v453 = vmul.f32 %v445, %v445
        %v454 = vmul.f32 %v446, %v446
        %v455 = vmul.f32 %v447, %v447
        %v456 = vmul.f32 %v448, %v448
        %v457 = vsub.f32 %v449, %v453
        %v458 = vsub.f32 %v450, %v454
        %v459 = vsub.f32 %v451, %v455
        %v460 = vsub.f32 %v452, %v456
        %v461 = vadd.f32 %v457, 1e-07
        %v462 = vadd.f32 %v458, 1e-07
        %v463 = vadd.f32 %v459, 1e-07
        %v464 = vadd.f32 %v460, 1e-07
        %v465 = vrcp.pop %v461
        %v466 = vrcp.pop %v462
        %v467 = vrcp.pop %v463
        %v468 = vrcp.pop %v464
        %v469 = vmul.f32 %v465, -0.5
        %v470 = vmul.f32 %v466, -0.5
        %v471 = vmul.f32 %v467, -0.5
        %v472 = vmul.f32 %v468, -0.5
        %v473 = vlog2.pop %v461
        %v474 = vmul.f32 %v473, 0.6931472
        %v475 = vlog2.pop %v462
        %v476 = vmul.f32 %v475, 0.6931472
        %v477 = vlog2.pop %v463
        %v478 = vmul.f32 %v477, 0.6931472
        %v479 = vlog2.pop %v464
        %v480 = vmul.f32 %v479, 0.6931472
        %v481 = vmul.f32 %v474, -0.5
        %v482 = vmul.f32 %v476, -0.5
        %v483 = vmul.f32 %v478, -0.5
        %v484 = vmul.f32 %v480, -0.5
        %v485 = vsub.f32 %v335, %v445
        %v486 = vsub.f32 %v340, %v446
        %v487 = vsub.f32 %v345, %v447
        %v488 = vsub.f32 %v350, %v448
        %v489 = vmul.f32 %v485, %v485
        %v490 = vmul.f32 %v486, %v486
        %v491 = vmul.f32 %v487, %v487
        %v492 = vmul.f32 %v488, %v488
        %v493 = vmul.f32 %v489, %v469
        %v494 = vmul.f32 %v490, %v470
        %v495 = vmul.f32 %v491, %v471
        %v496 = vmul.f32 %v492, %v472
        %v497 = vadd.f32 %v493, %v481
        %v498 = vadd.f32 %v494, %v482
        %v499 = vadd.f32 %v495, %v483
        %v500 = vadd.f32 %v496, %v484
        %v501 = vrot.slane %v355, 4
        %v502 = vadd.f32 %v355, %v501
        %v503 = vrot.slane %v502, 2
        %v504 = vadd.f32 %v502, %v503
        %v505 = vrot.slane %v504, 1
        %v506 = vadd.f32 %v504, %v505
        %v507 = vrot.slane %v360, 4
        %v508 = vadd.f32 %v360, %v507
        %v509 = vrot.slane %v508, 2
        %v510 = vadd.f32 %v508, %v509
        %v511 = vrot.slane %v510, 1
        %v512 = vadd.f32 %v510, %v511
        %v513 = vrot.slane %v365, 4
        %v514 = vadd.f32 %v365, %v513
        %v515 = vrot.slane %v514, 2
        %v516 = vadd.f32 %v514, %v515
        %v517 = vrot.slane %v516, 1
        %v518 = vadd.f32 %v516, %v517
        %v519 = vrot.slane %v370, 4
        %v520 = vadd.f32 %v370, %v519
        %v521 = vrot.slane %v520, 2
        %v522 = vadd.f32 %v520, %v521
        %v523 = vrot.slane %v522, 1
        %v524 = vadd.f32 %v522, %v523
        %v525 = vmul.f32 %v355, %v355
        %v526 = vmul.f32 %v360, %v360
        %v527 = vmul.f32 %v365, %v365
        %v528 = vmul.f32 %v370, %v370
        %v529 = vrot.slane %v525, 4
        %v530 = vadd.f32 %v525, %v529
        %v531 = vrot.slane %v530, 2
        %v532 = vadd.f32 %v530, %v531
        %v533 = vrot.slane %v532, 1
        %v534 = vadd.f32 %v532, %v533
        %v535 = vrot.slane %v526, 4
        %v536 = vadd.f32 %v526, %v535
        %v537 = vrot.slane %v536, 2
        %v538 = vadd.f32 %v536, %v537
        %v539 = vrot.slane %v538, 1
        %v540 = vadd.f32 %v538, %v539
        %v541 = vrot.slane %v527, 4
        %v542 = vadd.f32 %v527, %v541
        %v543 = vrot.slane %v542, 2
        %v544 = vadd.f32 %v542, %v543
        %v545 = vrot.slane %v544, 1
        %v546 = vadd.f32 %v544, %v545
        %v547 = vrot.slane %v528, 4
        %v548 = vadd.f32 %v528, %v547
        %v549 = vrot.slane %v548, 2
        %v550 = vadd.f32 %v548, %v549
        %v551 = vrot.slane %v550, 1
        %v552 = vadd.f32 %v550, %v551
        %v553 = vmul.f32 %v506, 0.12499999
        %v554 = vmul.f32 %v512, 0.12499999
        %v555 = vmul.f32 %v518, 0.12499999
        %v556 = vmul.f32 %v524, 0.12499999
        %v557 = vmul.f32 %v534, 0.12499999
        %v558 = vmul.f32 %v540, 0.12499999
        %v559 = vmul.f32 %v546, 0.12499999
        %v560 = vmul.f32 %v552, 0.12499999
        %v561 = vmul.f32 %v553, %v553
        %v562 = vmul.f32 %v554, %v554
        %v563 = vmul.f32 %v555, %v555
        %v564 = vmul.f32 %v556, %v556
        %v565 = vsub.f32 %v557, %v561
        %v566 = vsub.f32 %v558, %v562
        %v567 = vsub.f32 %v559, %v563
        %v568 = vsub.f32 %v560, %v564
        %v569 = vadd.f32 %v565, 1e-07
        %v570 = vadd.f32 %v566, 1e-07
        %v571 = vadd.f32 %v567, 1e-07
        %v572 = vadd.f32 %v568, 1e-07
        %v573 = vrcp.pop %v569
        %v574 = vrcp.pop %v570
        %v575 = vrcp.pop %v571
        %v576 = vrcp.pop %v572
        %v577 = vmul.f32 %v573, -0.5
        %v578 = vmul.f32 %v574, -0.5
        %v579 = vmul.f32 %v575, -0.5
        %v580 = vmul.f32 %v576, -0.5
        %v581 = vlog2.pop %v569
        %v582 = vmul.f32 %v581, 0.6931472
        %v583 = vlog2.pop %v570
        %v584 = vmul.f32 %v583, 0.6931472
        %v585 = vlog2.pop %v571
        %v586 = vmul.f32 %v585, 0.6931472
        %v587 = vlog2.pop %v572
        %v588 = vmul.f32 %v587, 0.6931472
        %v589 = vmul.f32 %v582, -0.5
        %v590 = vmul.f32 %v584, -0.5
        %v591 = vmul.f32 %v586, -0.5
        %v592 = vmul.f32 %v588, -0.5
        %v593 = vsub.f32 %v355, %v553
        %v594 = vsub.f32 %v360, %v554
        %v595 = vsub.f32 %v365, %v555
        %v596 = vsub.f32 %v370, %v556
        %v597 = vmul.f32 %v593, %v593
        %v598 = vmul.f32 %v594, %v594
        %v599 = vmul.f32 %v595, %v595
        %v600 = vmul.f32 %v596, %v596
        %v601 = vmul.f32 %v597, %v577
        %v602 = vmul.f32 %v598, %v578
        %v603 = vmul.f32 %v599, %v579
        %v604 = vmul.f32 %v600, %v580
        %v605 = vadd.f32 %v601, %v589
        %v606 = vadd.f32 %v602, %v590
        %v607 = vadd.f32 %v603, %v591
        %v608 = vadd.f32 %v604, %v592
        %v609 = vrot.slane %v375, 4
        %v610 = vadd.f32 %v375, %v609
        %v611 = vrot.slane %v610, 2
        %v612 = vadd.f32 %v610, %v611
        %v613 = vrot.slane %v612, 1
        %v614 = vadd.f32 %v612, %v613
        %v615 = vrot.slane %v380, 4
        %v616 = vadd.f32 %v380, %v615
        %v617 = vrot.slane %v616, 2
        %v618 = vadd.f32 %v616, %v617
        %v619 = vrot.slane %v618, 1
        %v620 = vadd.f32 %v618, %v619
        %v621 = vrot.slane %v385, 4
        %v622 = vadd.f32 %v385, %v621
        %v623 = vrot.slane %v622, 2
        %v624 = vadd.f32 %v622, %v623
        %v625 = vrot.slane %v624, 1
        %v626 = vadd.f32 %v624, %v625
        %v627 = vrot.slane %v390, 4
        %v628 = vadd.f32 %v390, %v627
        %v629 = vrot.slane %v628, 2
        %v630 = vadd.f32 %v628, %v629
        %v631 = vrot.slane %v630, 1
        %v632 = vadd.f32 %v630, %v631
        %v633 = vmul.f32 %v375, %v375
        %v634 = vmul.f32 %v380, %v380
        %v635 = vmul.f32 %v385, %v385
        %v636 = vmul.f32 %v390, %v390
        %v637 = vrot.slane %v633, 4
        %v638 = vadd.f32 %v633, %v637
        %v639 = vrot.slane %v638, 2
        %v640 = vadd.f32 %v638, %v639
        %v641 = vrot.slane %v640, 1
        %v642 = vadd.f32 %v640, %v641
        %v643 = vrot.slane %v634, 4
        %v644 = vadd.f32 %v634, %v643
        %v645 = vrot.slane %v644, 2
        %v646 = vadd.f32 %v644, %v645
        %v647 = vrot.slane %v646, 1
        %v648 = vadd.f32 %v646, %v647
        %v649 = vrot.slane %v635, 4
        %v650 = vadd.f32 %v635, %v649
        %v651 = vrot.slane %v650, 2
        %v652 = vadd.f32 %v650, %v651
        %v653 = vrot.slane %v652, 1
        %v654 = vadd.f32 %v652, %v653
        %v655 = vrot.slane %v636, 4
        %v656 = vadd.f32 %v636, %v655
        %v657 = vrot.slane %v656, 2
        %v658 = vadd.f32 %v656, %v657
        %v659 = vrot.slane %v658, 1
        %v660 = vadd.f32 %v658, %v659
        %v661 = vmul.f32 %v614, 0.12499999
        %v662 = vmul.f32 %v620, 0.12499999
        %v663 = vmul.f32 %v626, 0.12499999
        %v664 = vmul.f32 %v632, 0.12499999
        %v665 = vmul.f32 %v642, 0.12499999
        %v666 = vmul.f32 %v648, 0.12499999
        %v667 = vmul.f32 %v654, 0.12499999
        %v668 = vmul.f32 %v660, 0.12499999
        %v669 = vmul.f32 %v661, %v661
        %v670 = vmul.f32 %v662, %v662
        %v671 = vmul.f32 %v663, %v663
        %v672 = vmul.f32 %v664, %v664
        %v673 = vsub.f32 %v665, %v669
        %v674 = vsub.f32 %v666, %v670
        %v675 = vsub.f32 %v667, %v671
        %v676 = vsub.f32 %v668, %v672
        %v677 = vadd.f32 %v673, 1e-07
        %v678 = vadd.f32 %v674, 1e-07
        %v679 = vadd.f32 %v675, 1e-07
        %v680 = vadd.f32 %v676, 1e-07
        %v681 = vrcp.pop %v677
        %v682 = vrcp.pop %v678
        %v683 = vrcp.pop %v679
        %v684 = vrcp.pop %v680
        %v685 = vmul.f32 %v681, -0.5
        %v686 = vmul.f32 %v682, -0.5
        %v687 = vmul.f32 %v683, -0.5
        %v688 = vmul.f32 %v684, -0.5
        %v689 = vlog2.pop %v677
        %v690 = vmul.f32 %v689, 0.6931472
        %v691 = vlog2.pop %v678
        %v692 = vmul.f32 %v691, 0.6931472
        %v693 = vlog2.pop %v679
        %v694 = vmul.f32 %v693, 0.6931472
        %v695 = vlog2.pop %v680
        %v696 = vmul.f32 %v695, 0.6931472
        %v697 = vmul.f32 %v690, -0.5
        %v698 = vmul.f32 %v692, -0.5
        %v699 = vmul.f32 %v694, -0.5
        %v700 = vmul.f32 %v696, -0.5
        %v701 = vsub.f32 %v375, %v661
        %v702 = vsub.f32 %v380, %v662
        %v703 = vsub.f32 %v385, %v663
        %v704 = vsub.f32 %v390, %v664
        %v705 = vmul.f32 %v701, %v701
        %v706 = vmul.f32 %v702, %v702
        %v707 = vmul.f32 %v703, %v703
        %v708 = vmul.f32 %v704, %v704
        %v709 = vmul.f32 %v705, %v685
        %v710 = vmul.f32 %v706, %v686
        %v711 = vmul.f32 %v707, %v687
        %v712 = vmul.f32 %v708, %v688
        %v713 = vadd.f32 %v709, %v697
        %v714 = vadd.f32 %v710, %v698
        %v715 = vadd.f32 %v711, %v699
        %v716 = vadd.f32 %v712, %v700
        %v717 = vmax.f32 %v497, %v605
        %v718 = vmax.f32 %v498, %v606
        %v719 = vmax.f32 %v499, %v607
        %v720 = vmax.f32 %v500, %v608
        %v721 = vmax.f32 %v717, %v713
        %v722 = vmax.f32 %v718, %v714
        %v723 = vmax.f32 %v719, %v715
        %v724 = vmax.f32 %v720, %v716
        %v725 = vsub.f32 %v497, %v721
        %v726 = vsub.f32 %v498, %v722
        %v727 = vsub.f32 %v499, %v723
        %v728 = vsub.f32 %v500, %v724
        %v729 = vmul.f32 %v725, 1.442695
        %v730 = vpow.pop %v729
        %v731 = vmul.f32 %v726, 1.442695
        %v732 = vpow.pop %v731
        %v733 = vmul.f32 %v727, 1.442695
        %v734 = vpow.pop %v733
        %v735 = vmul.f32 %v728, 1.442695
        %v736 = vpow.pop %v735
        %v737 = vsub.f32 %v605, %v721
        %v738 = vsub.f32 %v606, %v722
        %v739 = vsub.f32 %v607, %v723
        %v740 = vsub.f32 %v608, %v724
        %v741 = vmul.f32 %v737, 1.442695
        %v742 = vpow.pop %v741
        %v743 = vmul.f32 %v738, 1.442695
        %v744 = vpow.pop %v743
        %v745 = vmul.f32 %v739, 1.442695
        %v746 = vpow.pop %v745
        %v747 = vmul.f32 %v740, 1.442695
        %v748 = vpow.pop %v747
        %v749 = vsub.f32 %v713, %v721
        %v750 = vsub.f32 %v714, %v722
        %v751 = vsub.f32 %v715, %v723
        %v752 = vsub.f32 %v716, %v724
        %v753 = vmul.f32 %v749, 1.442695
        %v754 = vpow.pop %v753
        %v755 = vmul.f32 %v750, 1.442695
        %v756 = vpow.pop %v755
        %v757 = vmul.f32 %v751, 1.442695
        %v758 = vpow.pop %v757
        %v759 = vmul.f32 %v752, 1.442695
        %v760 = vpow.pop %v759
        %v761 = vadd.f32 %v730, %v742
        %v762 = vadd.f32 %v732, %v744
        %v763 = vadd.f32 %v734, %v746
        %v764 = vadd.f32 %v736, %v748
        %v765 = vadd.f32 %v761, %v754
        %v766 = vadd.f32 %v762, %v756
        %v767 = vadd.f32 %v763, %v758
        %v768 = vadd.f32 %v764, %v760
        %v769 = vrcp.pop %v765
        %v770 = vrcp.pop %v766
        %v771 = vrcp.pop %v767
        %v772 = vrcp.pop %v768
        %v773 = vmul.f32 %v730, %v769
        %v774 = vmul.f32 %v732, %v770
        %v775 = vmul.f32 %v734, %v771
        %v776 = vmul.f32 %v736, %v772
        %v777 = vmul.f32 %v742, %v769
        %v778 = vmul.f32 %v744, %v770
        %v779 = vmul.f32 %v746, %v771
        %v780 = vmul.f32 %v748, %v772
        %v781 = vmul.f32 %v754, %v769
        %v782 = vmul.f32 %v756, %v770
        %v783 = vmul.f32 %v758, %v771
        %v784 = vmul.f32 %v760, %v772
        %v785 = vrot.slane %v773, 4
        %v786 = vadd.f32 %v773, %v785
        %v787 = vrot.slane %v786, 2
        %v788 = vadd.f32 %v786, %v787
        %v789 = vrot.slane %v788, 1
        %v790 = vadd.f32 %v788, %v789
        %v791 = vrot.slane %v774, 4
        %v792 = vadd.f32 %v774, %v791
        %v793 = vrot.slane %v792, 2
        %v794 = vadd.f32 %v792, %v793
        %v795 = vrot.slane %v794, 1
        %v796 = vadd.f32 %v794, %v795
        %v797 = vrot.slane %v775, 4
        %v798 = vadd.f32 %v775, %v797
        %v799 = vrot.slane %v798, 2
        %v800 = vadd.f32 %v798, %v799
        %v801 = vrot.slane %v800, 1
        %v802 = vadd.f32 %v800, %v801
        %v803 = vrot.slane %v776, 4
        %v804 = vadd.f32 %v776, %v803
        %v805 = vrot.slane %v804, 2
        %v806 = vadd.f32 %v804, %v805
        %v807 = vrot.slane %v806, 1
        %v808 = vadd.f32 %v806, %v807
        %v809 = vadd.f32 %v790, 1e-07
        %v810 = vadd.f32 %v796, 1e-07
        %v811 = vadd.f32 %v802, 1e-07
        %v812 = vadd.f32 %v808, 1e-07
        %v813 = vrcp.pop %v809
        %v814 = vrcp.pop %v810
        %v815 = vrcp.pop %v811
        %v816 = vrcp.pop %v812
        %v817 = vmul.f32 %v773, %v335
        %v818 = vmul.f32 %v774, %v340
        %v819 = vmul.f32 %v775, %v345
        %v820 = vmul.f32 %v776, %v350
        %v821 = vrot.slane %v817, 4
        %v822 = vadd.f32 %v817, %v821
        %v823 = vrot.slane %v822, 2
        %v824 = vadd.f32 %v822, %v823
        %v825 = vrot.slane %v824, 1
        %v826 = vadd.f32 %v824, %v825
        %v827 = vrot.slane %v818, 4
        %v828 = vadd.f32 %v818, %v827
        %v829 = vrot.slane %v828, 2
        %v830 = vadd.f32 %v828, %v829
        %v831 = vrot.slane %v830, 1
        %v832 = vadd.f32 %v830, %v831
        %v833 = vrot.slane %v819, 4
        %v834 = vadd.f32 %v819, %v833
        %v835 = vrot.slane %v834, 2
        %v836 = vadd.f32 %v834, %v835
        %v837 = vrot.slane %v836, 1
        %v838 = vadd.f32 %v836, %v837
        %v839 = vrot.slane %v820, 4
        %v840 = vadd.f32 %v820, %v839
        %v841 = vrot.slane %v840, 2
        %v842 = vadd.f32 %v840, %v841
        %v843 = vrot.slane %v842, 1
        %v844 = vadd.f32 %v842, %v843
        %v845 = vmul.f32 %v826, %v813
        %v846 = vmul.f32 %v832, %v814
        %v847 = vmul.f32 %v838, %v815
        %v848 = vmul.f32 %v844, %v816
        %v849 = vrot.slane %v777, 4
        %v850 = vadd.f32 %v777, %v849
        %v851 = vrot.slane %v850, 2
        %v852 = vadd.f32 %v850, %v851
        %v853 = vrot.slane %v852, 1
        %v854 = vadd.f32 %v852, %v853
        %v855 = vrot.slane %v778, 4
        %v856 = vadd.f32 %v778, %v855
        %v857 = vrot.slane %v856, 2
        %v858 = vadd.f32 %v856, %v857
        %v859 = vrot.slane %v858, 1
        %v860 = vadd.f32 %v858, %v859
        %v861 = vrot.slane %v779, 4
        %v862 = vadd.f32 %v779, %v861
        %v863 = vrot.slane %v862, 2
        %v864 = vadd.f32 %v862, %v863
        %v865 = vrot.slane %v864, 1
        %v866 = vadd.f32 %v864, %v865
        %v867 = vrot.slane %v780, 4
        %v868 = vadd.f32 %v780, %v867
        %v869 = vrot.slane %v868, 2
        %v870 = vadd.f32 %v868, %v869
        %v871 = vrot.slane %v870, 1
        %v872 = vadd.f32 %v870, %v871
        %v873 = vadd.f32 %v854, 1e-07
        %v874 = vadd.f32 %v860, 1e-07
        %v875 = vadd.f32 %v866, 1e-07
        %v876 = vadd.f32 %v872, 1e-07
        %v877 = vrcp.pop %v873
        %v878 = vrcp.pop %v874
        %v879 = vrcp.pop %v875
        %v880 = vrcp.pop %v876
        %v881 = vmul.f32 %v777, %v355
        %v882 = vmul.f32 %v778, %v360
        %v883 = vmul.f32 %v779, %v365
        %v884 = vmul.f32 %v780, %v370
        %v885 = vrot.slane %v881, 4
        %v886 = vadd.f32 %v881, %v885
        %v887 = vrot.slane %v886, 2
        %v888 = vadd.f32 %v886, %v887
        %v889 = vrot.slane %v888, 1
        %v890 = vadd.f32 %v888, %v889
        %v891 = vrot.slane %v882, 4
        %v892 = vadd.f32 %v882, %v891
        %v893 = vrot.slane %v892, 2
        %v894 = vadd.f32 %v892, %v893
        %v895 = vrot.slane %v894, 1
        %v896 = vadd.f32 %v894, %v895
        %v897 = vrot.slane %v883, 4
        %v898 = vadd.f32 %v883, %v897
        %v899 = vrot.slane %v898, 2
        %v900 = vadd.f32 %v898, %v899
        %v901 = vrot.slane %v900, 1
        %v902 = vadd.f32 %v900, %v901
        %v903 = vrot.slane %v884, 4
        %v904 = vadd.f32 %v884, %v903
        %v905 = vrot.slane %v904, 2
        %v906 = vadd.f32 %v904, %v905
        %v907 = vrot.slane %v906, 1
        %v908 = vadd.f32 %v906, %v907
        %v909 = vmul.f32 %v890, %v877
        %v910 = vmul.f32 %v896, %v878
        %v911 = vmul.f32 %v902, %v879
        %v912 = vmul.f32 %v908, %v880
        %v913 = vrot.slane %v781, 4
        %v914 = vadd.f32 %v781, %v913
        %v915 = vrot.slane %v914, 2
        %v916 = vadd.f32 %v914, %v915
        %v917 = vrot.slane %v916, 1
        %v918 = vadd.f32 %v916, %v917
        %v919 = vrot.slane %v782, 4
        %v920 = vadd.f32 %v782, %v919
        %v921 = vrot.slane %v920, 2
        %v922 = vadd.f32 %v920, %v921
        %v923 = vrot.slane %v922, 1
        %v924 = vadd.f32 %v922, %v923
        %v925 = vrot.slane %v783, 4
        %v926 = vadd.f32 %v783, %v925
        %v927 = vrot.slane %v926, 2
        %v928 = vadd.f32 %v926, %v927
        %v929 = vrot.slane %v928, 1
        %v930 = vadd.f32 %v928, %v929
        %v931 = vrot.slane %v784, 4
        %v932 = vadd.f32 %v784, %v931
        %v933 = vrot.slane %v932, 2
        %v934 = vadd.f32 %v932, %v933
        %v935 = vrot.slane %v934, 1
        %v936 = vadd.f32 %v934, %v935
        %v937 = vadd.f32 %v918, 1e-07
        %v938 = vadd.f32 %v924, 1e-07
        %v939 = vadd.f32 %v930, 1e-07
        %v940 = vadd.f32 %v936, 1e-07
        %v941 = vrcp.pop %v937
        %v942 = vrcp.pop %v938
        %v943 = vrcp.pop %v939
        %v944 = vrcp.pop %v940
        %v945 = vmul.f32 %v781, %v375
        %v946 = vmul.f32 %v782, %v380
        %v947 = vmul.f32 %v783, %v385
        %v948 = vmul.f32 %v784, %v390
        %v949 = vrot.slane %v945, 4
        %v950 = vadd.f32 %v945, %v949
        %v951 = vrot.slane %v950, 2
        %v952 = vadd.f32 %v950, %v951
        %v953 = vrot.slane %v952, 1
        %v954 = vadd.f32 %v952, %v953
        %v955 = vrot.slane %v946, 4
        %v956 = vadd.f32 %v946, %v955
        %v957 = vrot.slane %v956, 2
        %v958 = vadd.f32 %v956, %v957
        %v959 = vrot.slane %v958, 1
        %v960 = vadd.f32 %v958, %v959
        %v961 = vrot.slane %v947, 4
        %v962 = vadd.f32 %v947, %v961
        %v963 = vrot.slane %v962, 2
        %v964 = vadd.f32 %v962, %v963
        %v965 = vrot.slane %v964, 1
        %v966 = vadd.f32 %v964, %v965
        %v967 = vrot.slane %v948, 4
        %v968 = vadd.f32 %v948, %v967
        %v969 = vrot.slane %v968, 2
        %v970 = vadd.f32 %v968, %v969
        %v971 = vrot.slane %v970, 1
        %v972 = vadd.f32 %v970, %v971
        %v973 = vmul.f32 %v954, %v941
        %v974 = vmul.f32 %v960, %v942
        %v975 = vmul.f32 %v966, %v943
        %v976 = vmul.f32 %v972, %v944
        %v977 = vmul.f32 %v817, %v335
        %v978 = vmul.f32 %v818, %v340
        %v979 = vmul.f32 %v819, %v345
        %v980 = vmul.f32 %v820, %v350
        %v981 = vrot.slane %v977, 4
        %v982 = vadd.f32 %v977, %v981
        %v983 = vrot.slane %v982, 2
        %v984 = vadd.f32 %v982, %v983
        %v985 = vrot.slane %v984, 1
        %v986 = vadd.f32 %v984, %v985
        %v987 = vrot.slane %v978, 4
        %v988 = vadd.f32 %v978, %v987
        %v989 = vrot.slane %v988, 2
        %v990 = vadd.f32 %v988, %v989
        %v991 = vrot.slane %v990, 1
        %v992 = vadd.f32 %v990, %v991
        %v993 = vrot.slane %v979, 4
        %v994 = vadd.f32 %v979, %v993
        %v995 = vrot.slane %v994, 2
        %v996 = vadd.f32 %v994, %v995
        %v997 = vrot.slane %v996, 1
        %v998 = vadd.f32 %v996, %v997
        %v999 = vrot.slane %v980, 4
        %v1000 = vadd.f32 %v980, %v999
        %v1001 = vrot.slane %v1000, 2
        %v1002 = vadd.f32 %v1000, %v1001
        %v1003 = vrot.slane %v1002, 1
        %v1004 = vadd.f32 %v1002, %v1003
        %v1005 = vmul.f32 %v986, %v813
        %v1006 = vmul.f32 %v992, %v814
        %v1007 = vmul.f32 %v998, %v815
        %v1008 = vmul.f32 %v1004, %v816
        %v1009 = vmul.f32 %v845, %v845
        %v1010 = vmul.f32 %v846, %v846
        %v1011 = vmul.f32 %v847, %v847
        %v1012 = vmul.f32 %v848, %v848
        %v1013 = vsub.f32 %v1005, %v1009
        %v1014 = vsub.f32 %v1006, %v1010
        %v1015 = vsub.f32 %v1007, %v1011
        %v1016 = vsub.f32 %v1008, %v1012
        %v1017 = vadd.f32 %v1013, 1e-07
        %v1018 = vadd.f32 %v1014, 1e-07
        %v1019 = vadd.f32 %v1015, 1e-07
        %v1020 = vadd.f32 %v1016, 1e-07
        %v1021 = vrcp.pop %v1017
        %v1022 = vrcp.pop %v1018
        %v1023 = vrcp.pop %v1019
        %v1024 = vrcp.pop %v1020
        %v1025 = vmul.f32 %v1021, -0.5
        %v1026 = vmul.f32 %v1022, -0.5
        %v1027 = vmul.f32 %v1023, -0.5
        %v1028 = vmul.f32 %v1024, -0.5
        %v1029 = vlog2.pop %v809
        %v1030 = vmul.f32 %v1029, 0.6931472
        %v1031 = vlog2.pop %v810
        %v1032 = vmul.f32 %v1031, 0.6931472
        %v1033 = vlog2.pop %v811
        %v1034 = vmul.f32 %v1033, 0.6931472
        %v1035 = vlog2.pop %v812
        %v1036 = vmul.f32 %v1035, 0.6931472
        %v1037 = vlog2.pop %v1017
        %v1038 = vmul.f32 %v1037, 0.6931472
        %v1039 = vlog2.pop %v1018
        %v1040 = vmul.f32 %v1039, 0.6931472
        %v1041 = vlog2.pop %v1019
        %v1042 = vmul.f32 %v1041, 0.6931472
        %v1043 = vlog2.pop %v1020
        %v1044 = vmul.f32 %v1043, 0.6931472
        %v1045 = vmul.f32 %v1038, 0.5
        %v1046 = vmul.f32 %v1040, 0.5
        %v1047 = vmul.f32 %v1042, 0.5
        %v1048 = vmul.f32 %v1044, 0.5
        %v1049 = vsub.f32 %v1030, %v1045
        %v1050 = vsub.f32 %v1032, %v1046
        %v1051 = vsub.f32 %v1034, %v1047
        %v1052 = vsub.f32 %v1036, %v1048
        %v1053 = vsub.f32 %v335, %v845
        %v1054 = vsub.f32 %v340, %v846
        %v1055 = vsub.f32 %v345, %v847
        %v1056 = vsub.f32 %v350, %v848
        %v1057 = vmul.f32 %v1053, %v1053
        %v1058 = vmul.f32 %v1054, %v1054
        %v1059 = vmul.f32 %v1055, %v1055
        %v1060 = vmul.f32 %v1056, %v1056
        %v1061 = vmul.f32 %v1057, %v1025
        %v1062 = vmul.f32 %v1058, %v1026
        %v1063 = vmul.f32 %v1059, %v1027
        %v1064 = vmul.f32 %v1060, %v1028
        %v1065 = vadd.f32 %v1061, %v1049
        %v1066 = vadd.f32 %v1062, %v1050
        %v1067 = vadd.f32 %v1063, %v1051
        %v1068 = vadd.f32 %v1064, %v1052
        %v1069 = vmul.f32 %v881, %v355
        %v1070 = vmul.f32 %v882, %v360
        %v1071 = vmul.f32 %v883, %v365
        %v1072 = vmul.f32 %v884, %v370
        %v1073 = vrot.slane %v1069, 4
        %v1074 = vadd.f32 %v1069, %v1073
        %v1075 = vrot.slane %v1074, 2
        %v1076 = vadd.f32 %v1074, %v1075
        %v1077 = vrot.slane %v1076, 1
        %v1078 = vadd.f32 %v1076, %v1077
        %v1079 = vrot.slane %v1070, 4
        %v1080 = vadd.f32 %v1070, %v1079
        %v1081 = vrot.slane %v1080, 2
        %v1082 = vadd.f32 %v1080, %v1081
        %v1083 = vrot.slane %v1082, 1
        %v1084 = vadd.f32 %v1082, %v1083
        %v1085 = vrot.slane %v1071, 4
        %v1086 = vadd.f32 %v1071, %v1085
        %v1087 = vrot.slane %v1086, 2
        %v1088 = vadd.f32 %v1086, %v1087
        %v1089 = vrot.slane %v1088, 1
        %v1090 = vadd.f32 %v1088, %v1089
        %v1091 = vrot.slane %v1072, 4
        %v1092 = vadd.f32 %v1072, %v1091
        %v1093 = vrot.slane %v1092, 2
        %v1094 = vadd.f32 %v1092, %v1093
        %v1095 = vrot.slane %v1094, 1
        %v1096 = vadd.f32 %v1094, %v1095
        %v1097 = vmul.f32 %v1078, %v877
        %v1098 = vmul.f32 %v1084, %v878
        %v1099 = vmul.f32 %v1090, %v879
        %v1100 = vmul.f32 %v1096, %v880
        %v1101 = vmul.f32 %v909, %v909
        %v1102 = vmul.f32 %v910, %v910
        %v1103 = vmul.f32 %v911, %v911
        %v1104 = vmul.f32 %v912, %v912
        %v1105 = vsub.f32 %v1097, %v1101
        %v1106 = vsub.f32 %v1098, %v1102
        %v1107 = vsub.f32 %v1099, %v1103
        %v1108 = vsub.f32 %v1100, %v1104
        %v1109 = vadd.f32 %v1105, 1e-07
        %v1110 = vadd.f32 %v1106, 1e-07
        %v1111 = vadd.f32 %v1107, 1e-07
        %v1112 = vadd.f32 %v1108, 1e-07
        %v1113 = vrcp.pop %v1109
        %v1114 = vrcp.pop %v1110
        %v1115 = vrcp.pop %v1111
        %v1116 = vrcp.pop %v1112
        %v1117 = vmul.f32 %v1113, -0.5
        %v1118 = vmul.f32 %v1114, -0.5
        %v1119 = vmul.f32 %v1115, -0.5
        %v1120 = vmul.f32 %v1116, -0.5
        %v1121 = vlog2.pop %v873
        %v1122 = vmul.f32 %v1121, 0.6931472
        %v1123 = vlog2.pop %v874
        %v1124 = vmul.f32 %v1123, 0.6931472
        %v1125 = vlog2.pop %v875
        %v1126 = vmul.f32 %v1125, 0.6931472
        %v1127 = vlog2.pop %v876
        %v1128 = vmul.f32 %v1127, 0.6931472
        %v1129 = vlog2.pop %v1109
        %v1130 = vmul.f32 %v1129, 0.6931472
        %v1131 = vlog2.pop %v1110
        %v1132 = vmul.f32 %v1131, 0.6931472
        %v1133 = vlog2.pop %v1111
        %v1134 = vmul.f32 %v1133, 0.6931472
        %v1135 = vlog2.pop %v1112
        %v1136 = vmul.f32 %v1135, 0.6931472
        %v1137 = vmul.f32 %v1130, 0.5
        %v1138 = vmul.f32 %v1132, 0.5
        %v1139 = vmul.f32 %v1134, 0.5
        %v1140 = vmul.f32 %v1136, 0.5
        %v1141 = vsub.f32 %v1122, %v1137
        %v1142 = vsub.f32 %v1124, %v1138
        %v1143 = vsub.f32 %v1126, %v1139
        %v1144 = vsub.f32 %v1128, %v1140
        %v1145 = vsub.f32 %v355, %v909
        %v1146 = vsub.f32 %v360, %v910
        %v1147 = vsub.f32 %v365, %v911
        %v1148 = vsub.f32 %v370, %v912
        %v1149 = vmul.f32 %v1145, %v1145
        %v1150 = vmul.f32 %v1146, %v1146
        %v1151 = vmul.f32 %v1147, %v1147
        %v1152 = vmul.f32 %v1148, %v1148
        %v1153 = vmul.f32 %v1149, %v1117
        %v1154 = vmul.f32 %v1150, %v1118
        %v1155 = vmul.f32 %v1151, %v1119
        %v1156 = vmul.f32 %v1152, %v1120
        %v1157 = vadd.f32 %v1153, %v1141
        %v1158 = vadd.f32 %v1154, %v1142
        %v1159 = vadd.f32 %v1155, %v1143
        %v1160 = vadd.f32 %v1156, %v1144
        %v1161 = vmul.f32 %v945, %v375
        %v1162 = vmul.f32 %v946, %v380
        %v1163 = vmul.f32 %v947, %v385
        %v1164 = vmul.f32 %v948, %v390
        %v1165 = vrot.slane %v1161, 4
        %v1166 = vadd.f32 %v1161, %v1165
        %v1167 = vrot.slane %v1166, 2
        %v1168 = vadd.f32 %v1166, %v1167
        %v1169 = vrot.slane %v1168, 1
        %v1170 = vadd.f32 %v1168, %v1169
        %v1171 = vrot.slane %v1162, 4
        %v1172 = vadd.f32 %v1162, %v1171
        %v1173 = vrot.slane %v1172, 2
        %v1174 = vadd.f32 %v1172, %v1173
        %v1175 = vrot.slane %v1174, 1
        %v1176 = vadd.f32 %v1174, %v1175
        %v1177 = vrot.slane %v1163, 4
        %v1178 = vadd.f32 %v1163, %v1177
        %v1179 = vrot.slane %v1178, 2
        %v1180 = vadd.f32 %v1178, %v1179
        %v1181 = vrot.slane %v1180, 1
        %v1182 = vadd.f32 %v1180, %v1181
        %v1183 = vrot.slane %v1164, 4
        %v1184 = vadd.f32 %v1164, %v1183
        %v1185 = vrot.slane %v1184, 2
        %v1186 = vadd.f32 %v1184, %v1185
        %v1187 = vrot.slane %v1186, 1
        %v1188 = vadd.f32 %v1186, %v1187
        %v1189 = vmul.f32 %v1170, %v941
        %v1190 = vmul.f32 %v1176, %v942
        %v1191 = vmul.f32 %v1182, %v943
        %v1192 = vmul.f32 %v1188, %v944
        %v1193 = vmul.f32 %v973, %v973
        %v1194 = vmul.f32 %v974, %v974
        %v1195 = vmul.f32 %v975, %v975
        %v1196 = vmul.f32 %v976, %v976
        %v1197 = vsub.f32 %v1189, %v1193
        %v1198 = vsub.f32 %v1190, %v1194
        %v1199 = vsub.f32 %v1191, %v1195
        %v1200 = vsub.f32 %v1192, %v1196
        %v1201 = vadd.f32 %v1197, 1e-07
        %v1202 = vadd.f32 %v1198, 1e-07
        %v1203 = vadd.f32 %v1199, 1e-07
        %v1204 = vadd.f32 %v1200, 1e-07
        %v1205 = vrcp.pop %v1201
        %v1206 = vrcp.pop %v1202
        %v1207 = vrcp.pop %v1203
        %v1208 = vrcp.pop %v1204
        %v1209 = vmul.f32 %v1205, -0.5
        %v1210 = vmul.f32 %v1206, -0.5
        %v1211 = vmul.f32 %v1207, -0.5
        %v1212 = vmul.f32 %v1208, -0.5
        %v1213 = vlog2.pop %v937
        %v1214 = vmul.f32 %v1213, 0.6931472
        %v1215 = vlog2.pop %v938
        %v1216 = vmul.f32 %v1215, 0.6931472
        %v1217 = vlog2.pop %v939
        %v1218 = vmul.f32 %v1217, 0.6931472
        %v1219 = vlog2.pop %v940
        %v1220 = vmul.f32 %v1219, 0.6931472
        %v1221 = vlog2.pop %v1201
        %v1222 = vmul.f32 %v1221, 0.6931472
        %v1223 = vlog2.pop %v1202
        %v1224 = vmul.f32 %v1223, 0.6931472
        %v1225 = vlog2.pop %v1203
        %v1226 = vmul.f32 %v1225, 0.6931472
        %v1227 = vlog2.pop %v1204
        %v1228 = vmul.f32 %v1227, 0.6931472
        %v1229 = vmul.f32 %v1222, 0.5
        %v1230 = vmul.f32 %v1224, 0.5
        %v1231 = vmul.f32 %v1226, 0.5
        %v1232 = vmul.f32 %v1228, 0.5
        %v1233 = vsub.f32 %v1214, %v1229
        %v1234 = vsub.f32 %v1216, %v1230
        %v1235 = vsub.f32 %v1218, %v1231
        %v1236 = vsub.f32 %v1220, %v1232
        %v1237 = vsub.f32 %v375, %v973
        %v1238 = vsub.f32 %v380, %v974
        %v1239 = vsub.f32 %v385, %v975
        %v1240 = vsub.f32 %v390, %v976
        %v1241 = vmul.f32 %v1237, %v1237
        %v1242 = vmul.f32 %v1238, %v1238
        %v1243 = vmul.f32 %v1239, %v1239
        %v1244 = vmul.f32 %v1240, %v1240
        %v1245 = vmul.f32 %v1241, %v1209
        %v1246 = vmul.f32 %v1242, %v1210
        %v1247 = vmul.f32 %v1243, %v1211
        %v1248 = vmul.f32 %v1244, %v1212
        %v1249 = vadd.f32 %v1245, %v1233
        %v1250 = vadd.f32 %v1246, %v1234
        %v1251 = vadd.f32 %v1247, %v1235
        %v1252 = vadd.f32 %v1248, %v1236
        %v1253 = vmax.f32 %v1065, %v1157
        %v1254 = vmax.f32 %v1066, %v1158
        %v1255 = vmax.f32 %v1067, %v1159
        %v1256 = vmax.f32 %v1068, %v1160
        %v1257 = vmax.f32 %v1253, %v1249
        %v1258 = vmax.f32 %v1254, %v1250
        %v1259 = vmax.f32 %v1255, %v1251
        %v1260 = vmax.f32 %v1256, %v1252
        %v1261 = vsub.f32 %v1065, %v1257
        %v1262 = vsub.f32 %v1066, %v1258
        %v1263 = vsub.f32 %v1067, %v1259
        %v1264 = vsub.f32 %v1068, %v1260
        %v1265 = vmul.f32 %v1261, 1.442695
        %v1266 = vpow.pop %v1265
        %v1267 = vmul.f32 %v1262, 1.442695
        %v1268 = vpow.pop %v1267
        %v1269 = vmul.f32 %v1263, 1.442695
        %v1270 = vpow.pop %v1269
        %v1271 = vmul.f32 %v1264, 1.442695
        %v1272 = vpow.pop %v1271
        %v1273 = vsub.f32 %v1157, %v1257
        %v1274 = vsub.f32 %v1158, %v1258
        %v1275 = vsub.f32 %v1159, %v1259
        %v1276 = vsub.f32 %v1160, %v1260
        %v1277 = vmul.f32 %v1273, 1.442695
        %v1278 = vpow.pop %v1277
        %v1279 = vmul.f32 %v1274, 1.442695
        %v1280 = vpow.pop %v1279
        %v1281 = vmul.f32 %v1275, 1.442695
        %v1282 = vpow.pop %v1281
        %v1283 = vmul.f32 %v1276, 1.442695
        %v1284 = vpow.pop %v1283
        %v1285 = vsub.f32 %v1249, %v1257
        %v1286 = vsub.f32 %v1250, %v1258
        %v1287 = vsub.f32 %v1251, %v1259
        %v1288 = vsub.f32 %v1252, %v1260
        %v1289 = vmul.f32 %v1285, 1.442695
        %v1290 = vpow.pop %v1289
        %v1291 = vmul.f32 %v1286, 1.442695
        %v1292 = vpow.pop %v1291
        %v1293 = vmul.f32 %v1287, 1.442695
        %v1294 = vpow.pop %v1293
        %v1295 = vmul.f32 %v1288, 1.442695
        %v1296 = vpow.pop %v1295
        %v1297 = vadd.f32 %v1266, %v1278
        %v1298 = vadd.f32 %v1268, %v1280
        %v1299 = vadd.f32 %v1270, %v1282
        %v1300 = vadd.f32 %v1272, %v1284
        %v1301 = vadd.f32 %v1297, %v1290
        %v1302 = vadd.f32 %v1298, %v1292
        %v1303 = vadd.f32 %v1299, %v1294
        %v1304 = vadd.f32 %v1300, %v1296
        %v1305 = vrcp.pop %v1301
        %v1306 = vrcp.pop %v1302
        %v1307 = vrcp.pop %v1303
        %v1308 = vrcp.pop %v1304
        %v1309 = vmul.f32 %v1266, %v1305
        %v1310 = vmul.f32 %v1268, %v1306
        %v1311 = vmul.f32 %v1270, %v1307
        %v1312 = vmul.f32 %v1272, %v1308
        %v1313 = vmul.f32 %v1278, %v1305
        %v1314 = vmul.f32 %v1280, %v1306
        %v1315 = vmul.f32 %v1282, %v1307
        %v1316 = vmul.f32 %v1284, %v1308
        %v1317 = vmul.f32 %v1290, %v1305
        %v1318 = vmul.f32 %v1292, %v1306
        %v1319 = vmul.f32 %v1294, %v1307
        %v1320 = vmul.f32 %v1296, %v1308
        %v1321 = vrot.slane %v1309, 4
        %v1322 = vadd.f32 %v1309, %v1321
        %v1323 = vrot.slane %v1322, 2
        %v1324 = vadd.f32 %v1322, %v1323
        %v1325 = vrot.slane %v1324, 1
        %v1326 = vadd.f32 %v1324, %v1325
        %v1327 = vrot.slane %v1310, 4
        %v1328 = vadd.f32 %v1310, %v1327
        %v1329 = vrot.slane %v1328, 2
        %v1330 = vadd.f32 %v1328, %v1329
        %v1331 = vrot.slane %v1330, 1
        %v1332 = vadd.f32 %v1330, %v1331
        %v1333 = vrot.slane %v1311, 4
        %v1334 = vadd.f32 %v1311, %v1333
        %v1335 = vrot.slane %v1334, 2
        %v1336 = vadd.f32 %v1334, %v1335
        %v1337 = vrot.slane %v1336, 1
        %v1338 = vadd.f32 %v1336, %v1337
        %v1339 = vrot.slane %v1312, 4
        %v1340 = vadd.f32 %v1312, %v1339
        %v1341 = vrot.slane %v1340, 2
        %v1342 = vadd.f32 %v1340, %v1341
        %v1343 = vrot.slane %v1342, 1
        %v1344 = vadd.f32 %v1342, %v1343
        %v1345 = vadd.f32 %v1326, 1e-07
        %v1346 = vadd.f32 %v1332, 1e-07
        %v1347 = vadd.f32 %v1338, 1e-07
        %v1348 = vadd.f32 %v1344, 1e-07
        %v1349 = vrcp.pop %v1345
        %v1350 = vrcp.pop %v1346
        %v1351 = vrcp.pop %v1347
        %v1352 = vrcp.pop %v1348
        %v1353 = vmul.f32 %v1309, %v335
        %v1354 = vmul.f32 %v1310, %v340
        %v1355 = vmul.f32 %v1311, %v345
        %v1356 = vmul.f32 %v1312, %v350
        %v1357 = vrot.slane %v1353, 4
        %v1358 = vadd.f32 %v1353, %v1357
        %v1359 = vrot.slane %v1358, 2
        %v1360 = vadd.f32 %v1358, %v1359
        %v1361 = vrot.slane %v1360, 1
        %v1362 = vadd.f32 %v1360, %v1361
        %v1363 = vrot.slane %v1354, 4
        %v1364 = vadd.f32 %v1354, %v1363
        %v1365 = vrot.slane %v1364, 2
        %v1366 = vadd.f32 %v1364, %v1365
        %v1367 = vrot.slane %v1366, 1
        %v1368 = vadd.f32 %v1366, %v1367
        %v1369 = vrot.slane %v1355, 4
        %v1370 = vadd.f32 %v1355, %v1369
        %v1371 = vrot.slane %v1370, 2
        %v1372 = vadd.f32 %v1370, %v1371
        %v1373 = vrot.slane %v1372, 1
        %v1374 = vadd.f32 %v1372, %v1373
        %v1375 = vrot.slane %v1356, 4
        %v1376 = vadd.f32 %v1356, %v1375
        %v1377 = vrot.slane %v1376, 2
        %v1378 = vadd.f32 %v1376, %v1377
        %v1379 = vrot.slane %v1378, 1
        %v1380 = vadd.f32 %v1378, %v1379
        %v1381 = vmul.f32 %v1362, %v1349
        %v1382 = vmul.f32 %v1368, %v1350
        %v1383 = vmul.f32 %v1374, %v1351
        %v1384 = vmul.f32 %v1380, %v1352
        %v1385 = vrot.slane %v1313, 4
        %v1386 = vadd.f32 %v1313, %v1385
        %v1387 = vrot.slane %v1386, 2
        %v1388 = vadd.f32 %v1386, %v1387
        %v1389 = vrot.slane %v1388, 1
        %v1390 = vadd.f32 %v1388, %v1389
        %v1391 = vrot.slane %v1314, 4
        %v1392 = vadd.f32 %v1314, %v1391
        %v1393 = vrot.slane %v1392, 2
        %v1394 = vadd.f32 %v1392, %v1393
        %v1395 = vrot.slane %v1394, 1
        %v1396 = vadd.f32 %v1394, %v1395
        %v1397 = vrot.slane %v1315, 4
        %v1398 = vadd.f32 %v1315, %v1397
        %v1399 = vrot.slane %v1398, 2
        %v1400 = vadd.f32 %v1398, %v1399
        %v1401 = vrot.slane %v1400, 1
        %v1402 = vadd.f32 %v1400, %v1401
        %v1403 = vrot.slane %v1316, 4
        %v1404 = vadd.f32 %v1316, %v1403
        %v1405 = vrot.slane %v1404, 2
        %v1406 = vadd.f32 %v1404, %v1405
        %v1407 = vrot.slane %v1406, 1
        %v1408 = vadd.f32 %v1406, %v1407
        %v1409 = vadd.f32 %v1390, 1e-07
        %v1410 = vadd.f32 %v1396, 1e-07
        %v1411 = vadd.f32 %v1402, 1e-07
        %v1412 = vadd.f32 %v1408, 1e-07
        %v1413 = vrcp.pop %v1409
        %v1414 = vrcp.pop %v1410
        %v1415 = vrcp.pop %v1411
        %v1416 = vrcp.pop %v1412
        %v1417 = vmul.f32 %v1313, %v355
        %v1418 = vmul.f32 %v1314, %v360
        %v1419 = vmul.f32 %v1315, %v365
        %v1420 = vmul.f32 %v1316, %v370
        %v1421 = vrot.slane %v1417, 4
        %v1422 = vadd.f32 %v1417, %v1421
        %v1423 = vrot.slane %v1422, 2
        %v1424 = vadd.f32 %v1422, %v1423
        %v1425 = vrot.slane %v1424, 1
        %v1426 = vadd.f32 %v1424, %v1425
        %v1427 = vrot.slane %v1418, 4
        %v1428 = vadd.f32 %v1418, %v1427
        %v1429 = vrot.slane %v1428, 2
        %v1430 = vadd.f32 %v1428, %v1429
        %v1431 = vrot.slane %v1430, 1
        %v1432 = vadd.f32 %v1430, %v1431
        %v1433 = vrot.slane %v1419, 4
        %v1434 = vadd.f32 %v1419, %v1433
        %v1435 = vrot.slane %v1434, 2
        %v1436 = vadd.f32 %v1434, %v1435
        %v1437 = vrot.slane %v1436, 1
        %v1438 = vadd.f32 %v1436, %v1437
        %v1439 = vrot.slane %v1420, 4
        %v1440 = vadd.f32 %v1420, %v1439
        %v1441 = vrot.slane %v1440, 2
        %v1442 = vadd.f32 %v1440, %v1441
        %v1443 = vrot.slane %v1442, 1
        %v1444 = vadd.f32 %v1442, %v1443
        %v1445 = vmul.f32 %v1426, %v1413
        %v1446 = vmul.f32 %v1432, %v1414
        %v1447 = vmul.f32 %v1438, %v1415
        %v1448 = vmul.f32 %v1444, %v1416
        %v1449 = vrot.slane %v1317, 4
        %v1450 = vadd.f32 %v1317, %v1449
        %v1451 = vrot.slane %v1450, 2
        %v1452 = vadd.f32 %v1450, %v1451
        %v1453 = vrot.slane %v1452, 1
        %v1454 = vadd.f32 %v1452, %v1453
        %v1455 = vrot.slane %v1318, 4
        %v1456 = vadd.f32 %v1318, %v1455
        %v1457 = vrot.slane %v1456, 2
        %v1458 = vadd.f32 %v1456, %v1457
        %v1459 = vrot.slane %v1458, 1
        %v1460 = vadd.f32 %v1458, %v1459
        %v1461 = vrot.slane %v1319, 4
        %v1462 = vadd.f32 %v1319, %v1461
        %v1463 = vrot.slane %v1462, 2
        %v1464 = vadd.f32 %v1462, %v1463
        %v1465 = vrot.slane %v1464, 1
        %v1466 = vadd.f32 %v1464, %v1465
        %v1467 = vrot.slane %v1320, 4
        %v1468 = vadd.f32 %v1320, %v1467
        %v1469 = vrot.slane %v1468, 2
        %v1470 = vadd.f32 %v1468, %v1469
        %v1471 = vrot.slane %v1470, 1
        %v1472 = vadd.f32 %v1470, %v1471
        %v1473 = vadd.f32 %v1454, 1e-07
        %v1474 = vadd.f32 %v1460, 1e-07
        %v1475 = vadd.f32 %v1466, 1e-07
        %v1476 = vadd.f32 %v1472, 1e-07
        %v1477 = vrcp.pop %v1473
        %v1478 = vrcp.pop %v1474
        %v1479 = vrcp.pop %v1475
        %v1480 = vrcp.pop %v1476
        %v1481 = vmul.f32 %v1317, %v375
        %v1482 = vmul.f32 %v1318, %v380
        %v1483 = vmul.f32 %v1319, %v385
        %v1484 = vmul.f32 %v1320, %v390
        %v1485 = vrot.slane %v1481, 4
        %v1486 = vadd.f32 %v1481, %v1485
        %v1487 = vrot.slane %v1486, 2
        %v1488 = vadd.f32 %v1486, %v1487
        %v1489 = vrot.slane %v1488, 1
        %v1490 = vadd.f32 %v1488, %v1489
        %v1491 = vrot.slane %v1482, 4
        %v1492 = vadd.f32 %v1482, %v1491
        %v1493 = vrot.slane %v1492, 2
        %v1494 = vadd.f32 %v1492, %v1493
        %v1495 = vrot.slane %v1494, 1
        %v1496 = vadd.f32 %v1494, %v1495
        %v1497 = vrot.slane %v1483, 4
        %v1498 = vadd.f32 %v1483, %v1497
        %v1499 = vrot.slane %v1498, 2
        %v1500 = vadd.f32 %v1498, %v1499
        %v1501 = vrot.slane %v1500, 1
        %v1502 = vadd.f32 %v1500, %v1501
        %v1503 = vrot.slane %v1484, 4
        %v1504 = vadd.f32 %v1484, %v1503
        %v1505 = vrot.slane %v1504, 2
        %v1506 = vadd.f32 %v1504, %v1505
        %v1507 = vrot.slane %v1506, 1
        %v1508 = vadd.f32 %v1506, %v1507
        %v1509 = vmul.f32 %v1490, %v1477
        %v1510 = vmul.f32 %v1496, %v1478
        %v1511 = vmul.f32 %v1502, %v1479
        %v1512 = vmul.f32 %v1508, %v1480
        %v1513 = vld [vmem:[%s2] sm:$0x1]
        %1515 = vset.pattern.permute.xlu0 0
        %1516 = vperm.xlu0 %1515, %v1513
        %v1517 = vpop.permute.xlu0 %1516
        %v1519 = vadd.f32 %v1381, %v1517
        %1520 = vst [vmem:[%s214] sm:$0x1] %v1519
        %v1521 = vld [vmem:[%s2 + $0x1] sm:$0x1]
        %1523 = vset.pattern.permute.xlu0 0
        %1524 = vperm.xlu0 %1523, %v1521
        %v1525 = vpop.permute.xlu0 %1524
        %v1527 = vadd.f32 %v1382, %v1525
        %1528 = vst [vmem:[%s214 + $0x1] sm:$0x1] %v1527
        %v1529 = vld [vmem:[%s2 + $0x2] sm:$0x1]
        %1531 = vset.pattern.permute.xlu0 0
        %1532 = vperm.xlu0 %1531, %v1529
        %v1533 = vpop.permute.xlu0 %1532
        %v1535 = vadd.f32 %v1383, %v1533
        %1536 = vst [vmem:[%s214 + $0x2] sm:$0x1] %v1535
        %v1537 = vld [vmem:[%s2 + $0x3] sm:$0x1]
        %1539 = vset.pattern.permute.xlu0 0
        %1540 = vperm.xlu0 %1539, %v1537
        %v1541 = vpop.permute.xlu0 %1540
        %v1543 = vadd.f32 %v1384, %v1541
        %1544 = vst [vmem:[%s214 + $0x3] sm:$0x1] %v1543
        %v1545 = vld [vmem:[%s2 + $0x4] sm:$0x1]
        %1547 = vset.pattern.permute.xlu0 0
        %1548 = vperm.xlu0 %1547, %v1545
        %v1549 = vpop.permute.xlu0 %1548
        %v1551 = vadd.f32 %v1445, %v1549
        %1552 = vst [vmem:[%s214 + $0x4] sm:$0x1] %v1551
        %v1553 = vld [vmem:[%s2 + $0x5] sm:$0x1]
        %1555 = vset.pattern.permute.xlu0 0
        %1556 = vperm.xlu0 %1555, %v1553
        %v1557 = vpop.permute.xlu0 %1556
        %v1559 = vadd.f32 %v1446, %v1557
        %1560 = vst [vmem:[%s214 + $0x5] sm:$0x1] %v1559
        %v1561 = vld [vmem:[%s2 + $0x6] sm:$0x1]
        %1563 = vset.pattern.permute.xlu0 0
        %1564 = vperm.xlu0 %1563, %v1561
        %v1565 = vpop.permute.xlu0 %1564
        %v1567 = vadd.f32 %v1447, %v1565
        %1568 = vst [vmem:[%s214 + $0x6] sm:$0x1] %v1567
        %v1569 = vld [vmem:[%s2 + $0x7] sm:$0x1]
        %1571 = vset.pattern.permute.xlu0 0
        %1572 = vperm.xlu0 %1571, %v1569
        %v1573 = vpop.permute.xlu0 %1572
        %v1575 = vadd.f32 %v1448, %v1573
        %1576 = vst [vmem:[%s214 + $0x7] sm:$0x1] %v1575
        %v1577 = vld [vmem:[%s2 + $0x8] sm:$0x1]
        %1579 = vset.pattern.permute.xlu0 0
        %1580 = vperm.xlu0 %1579, %v1577
        %v1581 = vpop.permute.xlu0 %1580
        %v1583 = vadd.f32 %v1509, %v1581
        %1584 = vst [vmem:[%s214 + $0x8] sm:$0x1] %v1583
        %v1585 = vld [vmem:[%s2 + $0x9] sm:$0x1]
        %1587 = vset.pattern.permute.xlu0 0
        %1588 = vperm.xlu0 %1587, %v1585
        %v1589 = vpop.permute.xlu0 %1588
        %v1591 = vadd.f32 %v1510, %v1589
        %1592 = vst [vmem:[%s214 + $0x9] sm:$0x1] %v1591
        %v1593 = vld [vmem:[%s2 + $0xa] sm:$0x1]
        %1595 = vset.pattern.permute.xlu0 0
        %1596 = vperm.xlu0 %1595, %v1593
        %v1597 = vpop.permute.xlu0 %1596
        %v1599 = vadd.f32 %v1511, %v1597
        %1600 = vst [vmem:[%s214 + $0xa] sm:$0x1] %v1599
        %v1601 = vld [vmem:[%s2 + $0xb] sm:$0x1]
        %1603 = vset.pattern.permute.xlu0 0
        %1604 = vperm.xlu0 %1603, %v1601
        %v1605 = vpop.permute.xlu0 %1604
        %v1607 = vadd.f32 %v1512, %v1605
        %1608 = vst [vmem:[%s214 + $0xb] sm:$0x1] %v1607
        %s1609 = sand.u32 %s93, 1
        %s1610 = scalar_lea.sflag [#allocation4], %s1609
        %s1611 = sand.u32 %s93, 1
        %s1612 = smul.addr %s1611, 16
        %s1613 = scalar_lea.vmem [#allocation3], %s1612
        // Predicated region
        $region71: #{tpu_custom_call.1} parent=65 // pred_check
          %p1614 = pneg %p103
        $region72: #{tpu_custom_call.1} parent=65 // pred_check_branch
          %1616 = sbr.rel (%p1614) target = $region74
        $region73: #{tpu_custom_call.1} parent=65 // pred_region
          %s1618 = ssub.s32 256, 256
          %1619 = vsyncadd %s1610, %s1618
          %s1620 = smul.addr %s17, 128
          %s1621 = scalar_lea.hbm %s3, %s1620
          %s1622 = sshll.u32 %s1613, 4
          %s1623 = int_to_ptr.vmem [resolvable:$true] %s1622
          %1628 = dma.vmem_to_hbm [thread:$0]  %s1623, 256, %s1621, %s1610, 128, 256, 8
        $region74: #{tpu_custom_call.1} parent=65 // pred_fallthru
          _
      $region66: #{tpu_custom_call.1} parent=5 // pred_fallthru
        _
      %p1629 = scmp.le.s32.totalorder 2, %s12
      // Predicated region
      $region75: #{tpu_custom_call.1} parent=5 // pred_check
        %p1630 = pneg %p1629
      $region76: #{tpu_custom_call.1} parent=5 // pred_check_branch
        %1632 = sbr.rel (%p1630) target = $region78
      $region77: #{tpu_custom_call.1} parent=5 // pred_region
        %s1633 = ssub.s32 %s12, 2
        // Predicated region
        $region79: #{tpu_custom_call.1} parent=77 // pred_check
          %p1634 = pneg %p109
        $region80: #{tpu_custom_call.1} parent=77 // pred_check_branch
          %1636 = sbr.rel (%p1634) target = $region82
        $region81: #{tpu_custom_call.1} parent=77 // pred_region
          %s1637 = sand.u32 %s94, 1
          %s1638 = scalar_lea.sflag [#allocation4], %s1637
          %s1639 = sand.u32 %s94, 1
          %s1640 = smul.addr %s1639, 16
          %s1641 = scalar_lea.vmem [#allocation3], %s1640
          %1642 = dma.done %s1638, 256
        $region82: #{tpu_custom_call.1} parent=77 // pred_fallthru
          _
      $region78: #{tpu_custom_call.1} parent=5 // pred_fallthru
        _
    $region6: #{tpu_custom_call.1} parent=1 // loop_footer
      %s16 = sadd.s32 1, %s12
    $region7: #{tpu_custom_call.1} parent=1 // loop_footer_branch
      %11 = sbr.rel target = $region3
    $region8: #{tpu_custom_call.1} parent=1 // loop_exit
      _
    %1643 = vsyncpa [#allocation4], 1
    %s1644 = scalar_lea.sflag [#allocation4], 1
    %1645 = vsyncpa %s1644, 1

</llo_original>
